<compile_context>
chip_gen: v6e
topology: v6e:2x2x1
jax: 0.10.0
libtpu: 0.0.40
codegen_flags: <defaults>
</compile_context>

<pallas_src>
import functools

import jax
import jax.numpy as jnp
from jax import lax
from jax.experimental import pallas as pl
from jax.experimental.pallas import tpu as pltpu


def _gau_kernel(zf_ref, xf_ref,
                w_xqg_ref, b_xqg_ref,
                w_zsg_ref, b_zsg_ref,
                wf_ref, bf_ref,
                out_ref, *, C):
    f32 = jnp.float32
    w_xqg = w_xqg_ref[...]   # (2C, C): rows [0:C]=query, [C:2C]=g (BN folded)
    b_xqg = b_xqg_ref[...]   # (2C, 1)
    w_zsg = w_zsg_ref[...]   # (2C, C): rows [0:C]=support, [C:2C]=g
    b_zsg = b_zsg_ref[...]   # (2C, 1)
    wf = wf_ref[...]         # (Cout, 2C), BN folded
    bf = bf_ref[...]         # (Cout, 1)

    bb = zf_ref.shape[0]     # static: 1 (per-core grid) or B (collapsed grid)
    for b in range(bb):
        zf = zf_ref[b]       # (C, Nz)  channel-major, spatial on the lane dim
        xf = xf_ref[b]       # (C, Nx)

        # Fused 1x1 convs: one (2C, C) @ (C, N) matmul per input.
        x_both = jnp.dot(w_xqg, xf, preferred_element_type=f32) + b_xqg  # (2C, Nx)
        z_both = jnp.dot(w_zsg, zf, preferred_element_type=f32) + b_zsg  # (2C, Nz)
        xf_trans = x_both[:C, :]                         # query(xf)
        xf_g = jnp.maximum(x_both[C:, :], 0.0)           # g(xf) (BN+ReLU folded)
        zf_trans = z_both[:C, :]                         # support(zf)
        zf_g = jnp.maximum(z_both[C:, :], 0.0)           # g(zf)

        # Similarity kept transposed as (Nz, Nx) so Nx stays lane-dense;
        # contracts the channel axis of both operands (trans_a matmul).
        sim = lax.dot_general(zf_trans, xf_trans,
                              (((0,), (0,)), ((), ())),
                              preferred_element_type=f32)        # (Nz, Nx)

        # Softmax over Nz (== torch softmax dim=2 of (B, Nx, Nz)).
        sim = sim - jnp.max(sim, axis=0, keepdims=True)
        p = jnp.exp(sim)
        inv = pl.reciprocal(jnp.sum(p, axis=0, keepdims=True), approx=False)
        p = p * inv

        # Attention-weighted aggregation, channel-major: (C, Nx).
        emb = jnp.dot(zf_g, p, preferred_element_type=f32)

        # fi over channel-concat [embedding; xf_g]: single (Cout, 2C) matmul.
        cat = jnp.concatenate([emb, xf_g], axis=0)                # (2C, Nx)
        out = jnp.dot(wf, cat, preferred_element_type=f32) + bf   # (Cout, Nx)
        out_ref[b] = jnp.maximum(out, 0.0).astype(out_ref.dtype)


def _fold_bn(w, b, gamma, beta, mean, var, eps):
    """Fold eval-mode BatchNorm into a preceding 1x1 conv. w: (Cout, Cin)."""
    scale = gamma / jnp.sqrt(var + eps)
    return w * scale[:, None], (b - mean) * scale + beta


def _is_multi_tensorcore():
    try:
        kind = jax.devices()[0].device_kind.lower()
    except Exception:
        return False
    # v7x has 2 TensorCores per chip; v5e/v6e are single-TC.
    return ("v7" in kind) or ("7x" in kind)


def gau_forward_pallas(zf_nchw, xf_nchw, params, *, eps=1e-5, batch_grid=None):
    """zf: (B, C, Hz, Wz), xf: (B, C, Hx, Wx) -> (B, Cout, Hx, Wx)."""
    B, C, Hz, Wz = zf_nchw.shape
    _, _, Hx, Wx = xf_nchw.shape
    Nz, Nx = Hz * Wz, Hx * Wx
    Cout = params["wf"].shape[0]

    # Fold eval-mode BN into the g / fi convs (wrapper-side, traced once).
    wg_f, bg_f = _fold_bn(params["wg"], params["bg"], params["g_gamma"],
                          params["g_beta"], params["g_mean"], params["g_var"], eps)
    wf_f, bf_f = _fold_bn(params["wf"], params["bf"], params["f_gamma"],
                          params["f_beta"], params["f_mean"], params["f_var"], eps)

    # Fuse [query; g] (applied to xf) and [support; g] (applied to zf) into
    # single (2C, C) weights -> one MXU setup per input instead of two.
    w_xqg = jnp.concatenate([params["wq"], wg_f], axis=0)           # (2C, C)
    b_xqg = jnp.concatenate([params["bq"], bg_f], axis=0)[:, None]  # (2C, 1)
    w_zsg = jnp.concatenate([params["ws"], wg_f], axis=0)
    b_zsg = jnp.concatenate([params["bs"], bg_f], axis=0)[:, None]
    bf_col = bf_f[:, None]                                          # (Cout, 1)

    # NCHW-native, channel-major flatten: pure reshapes, no HBM transposes.
    zf = zf_nchw.reshape(B, C, Nz)
    xf = xf_nchw.reshape(B, C, Nx)

    if batch_grid is None:
        # Shard the batch across TensorCores only where there is >1 TC.
        batch_grid = (B > 1) and _is_multi_tensorcore()
    bb = 1 if batch_grid else B          # batch elements per grid step
    grid = (B // bb,)

    wspec = lambda shape: pl.BlockSpec(shape, lambda i, _s=shape: (0,) * len(_s))

    # NOTE: at these toy sizes VMEM is a non-issue on all generations; if
    # scaled to production SiamGAT sizes (C=256, Nx~625), set
    # vmem_limit_bytes explicitly and consider pipeline_mode=pl.Buffered(1)
    # on the constant weight blocks.
    out = pl.pallas_call(
        functools.partial(_gau_kernel, C=C),
        out_shape=jax.ShapeDtypeStruct((B, Cout, Nx), jnp.float32),
        grid_spec=pltpu.PrefetchScalarGridSpec(
            num_scalar_prefetch=0,
            grid=grid,
            in_specs=[
                pl.BlockSpec((bb, C, Nz), lambda i: (i, 0, 0)),
                pl.BlockSpec((bb, C, Nx), lambda i: (i, 0, 0)),
                wspec((2 * C, C)), wspec((2 * C, 1)),      # [query; g]
                wspec((2 * C, C)), wspec((2 * C, 1)),      # [support; g]
                wspec((Cout, 2 * C)), wspec((Cout, 1)),    # fi (BN folded)
            ],
            out_specs=pl.BlockSpec((bb, Cout, Nx), lambda i: (i, 0, 0)),
        ),
        compiler_params=pltpu.CompilerParams(
            dimension_semantics=("parallel",)),
    )(zf, xf, w_xqg, b_xqg, w_zsg, b_zsg, wf_f, bf_col)

    # (B, Cout, Nx) is already NCHW-flattened -> reshape only.
    return out.reshape(B, Cout, Hx, Wx)


def make_params(key, in_channel, out_channel):
    """PyTorch-convention parameters (conv weights (Cout, Cin), eval-mode BN)."""
    C, Co = in_channel, out_channel
    ks = jax.random.split(key, 16)
    s = 0.1
    return {
        "wq": s * jax.random.normal(ks[0], (C, C), jnp.float32),
        "bq": s * jax.random.normal(ks[1], (C,), jnp.float32),
        "ws": s * jax.random.normal(ks[2], (C, C), jnp.float32),
        "bs": s * jax.random.normal(ks[3], (C,), jnp.float32),
        "wg": s * jax.random.normal(ks[4], (C, C), jnp.float32),
        "bg": s * jax.random.normal(ks[5], (C,), jnp.float32),
        "g_gamma": 1.0 + 0.1 * jax.random.normal(ks[6], (C,), jnp.float32),
        "g_beta": 0.1 * jax.random.normal(ks[7], (C,), jnp.float32),
        "g_mean": 0.05 * jax.random.normal(ks[8], (C,), jnp.float32),
        "g_var": 1.0 + 0.1 * jnp.abs(jax.random.normal(ks[9], (C,), jnp.float32)),
        "wf": s * jax.random.normal(ks[10], (Co, 2 * C), jnp.float32),
        "bf": s * jax.random.normal(ks[11], (Co,), jnp.float32),
        "f_gamma": 1.0 + 0.1 * jax.random.normal(ks[12], (Co,), jnp.float32),
        "f_beta": 0.1 * jax.random.normal(ks[13], (Co,), jnp.float32),
        "f_mean": 0.05 * jax.random.normal(ks[14], (Co,), jnp.float32),
        "f_var": 1.0 + 0.1 * jnp.abs(jax.random.normal(ks[15], (Co,), jnp.float32)),
    }


def gau_reference(zf, xf, params, eps=1e-5):
    """Pure-JAX mirror of the PyTorch forward (eval-mode BatchNorm)."""
    def conv1x1(x, w, b):
        return jnp.einsum("oc,bchw->bohw", w, x) + b[None, :, None, None]

    def bn(x, gamma, beta, mean, var):
        s = gamma / jnp.sqrt(var + eps)
        return x * s[None, :, None, None] + (beta - mean * s)[None, :, None, None]

    xf_trans = conv1x1(xf, params["wq"], params["bq"])
    zf_trans = conv1x1(zf, params["ws"], params["bs"])
    xf_g = jax.nn.relu(bn(conv1x1(xf, params["wg"], params["bg"]),
                          params["g_gamma"], params["g_beta"],
                          params["g_mean"], params["g_var"]))
    zf_g = jax.nn.relu(bn(conv1x1(zf, params["wg"], params["bg"]),
                          params["g_gamma"], params["g_beta"],
                          params["g_mean"], params["g_var"]))

    B, C, Hx, Wx = xf.shape
    _, _, Hz, Wz = zf.shape
    zt = zf_trans.reshape(B, C, Hz * Wz)                      # (B, C, Nz)
    zg = zf_g.reshape(B, C, Hz * Wz).transpose(0, 2, 1)       # (B, Nz, C)
    xt = xf_trans.reshape(B, C, Hx * Wx).transpose(0, 2, 1)   # (B, Nx, C)

    sim = jax.nn.softmax(jnp.einsum("bnc,bcm->bnm", xt, zt), axis=-1)
    emb = jnp.einsum("bnm,bmc->bnc", sim, zg)                 # (B, Nx, C)
    emb = emb.transpose(0, 2, 1).reshape(B, C, Hx, Wx)

    cat = jnp.concatenate([emb, xf_g], axis=1)
    return jax.nn.relu(bn(conv1x1(cat, params["wf"], params["bf"]),
                          params["f_gamma"], params["f_beta"],
                          params["f_mean"], params["f_var"]))


if __name__ == "__main__":
    key = jax.random.PRNGKey(0)
    k_z, k_x, k_p = jax.random.split(key, 3)

    B, C, Cout = 2, 32, 64
    Hz = Wz = 8     # template ("zf") spatial
    Hx = Wx = 16    # search ("xf") spatial

    zf = jax.random.normal(k_z, (B, C, Hz, Wz), jnp.float32)
    xf = jax.random.normal(k_x, (B, C, Hx, Wx), jnp.float32)
    params = make_params(k_p, C, Cout)

    out = gau_forward_pallas(zf, xf, params)
    jax.block_until_ready(out)

    ref = gau_reference(zf, xf, params)
    assert out.shape == (B, Cout, Hx, Wx)
    max_err = float(jnp.max(jnp.abs(out - ref)))
    assert jnp.allclose(out, ref, atol=5e-4, rtol=5e-4), max_err

    print("KERNEL_OK")
</pallas_src>

<mosaic_0001>
module attributes {stable_mosaic.version = 11 : i64} {
  func.func @_gau_kernel(%arg0: i32, %arg1: memref<2x32x64xf32, #tpu.memory_space<vmem>>, %arg2: memref<2x32x256xf32, #tpu.memory_space<vmem>>, %arg3: memref<64x32xf32, #tpu.memory_space<vmem>>, %arg4: memref<64x1xf32, #tpu.memory_space<vmem>>, %arg5: memref<64x32xf32, #tpu.memory_space<vmem>>, %arg6: memref<64x1xf32, #tpu.memory_space<vmem>>, %arg7: memref<64x64xf32, #tpu.memory_space<vmem>>, %arg8: memref<64x1xf32, #tpu.memory_space<vmem>>, %arg9: memref<2x64x256xf32, #tpu.memory_space<vmem>>) attributes {dimension_semantics = [#tpu.dimension_semantics<parallel>], iteration_bounds = array<i64: 1>, scalar_prefetch = 0 : i64, scratch_operands = 0 : i64, tpu.core_type = #tpu.core_type<tc>, window_params = [{transform_indices = @transform_0, window_bounds = array<i64: 2, 32, 64>}, {transform_indices = @transform_1, window_bounds = array<i64: 2, 32, 256>}, {pipeline_mode = #tpu.pipeline_mode<synchronous>, transform_indices = @transform_2, window_bounds = array<i64: 64, 32>}, {pipeline_mode = #tpu.pipeline_mode<synchronous>, transform_indices = @transform_3, window_bounds = array<i64: 64, 1>}, {pipeline_mode = #tpu.pipeline_mode<synchronous>, transform_indices = @transform_4, window_bounds = array<i64: 64, 32>}, {pipeline_mode = #tpu.pipeline_mode<synchronous>, transform_indices = @transform_5, window_bounds = array<i64: 64, 1>}, {pipeline_mode = #tpu.pipeline_mode<synchronous>, transform_indices = @transform_6, window_bounds = array<i64: 64, 64>}, {pipeline_mode = #tpu.pipeline_mode<synchronous>, transform_indices = @transform_7, window_bounds = array<i64: 64, 1>}, {transform_indices = @transform_8, window_bounds = array<i64: 2, 64, 256>}]} {
    %c0 = arith.constant 0 : index
    %c0_0 = arith.constant 0 : index
    %0 = vector.load %arg3[%c0, %c0_0] : memref<64x32xf32, #tpu.memory_space<vmem>>, vector<64x32xf32>
    %c0_1 = arith.constant 0 : index
    %c0_2 = arith.constant 0 : index
    %1 = vector.load %arg4[%c0_1, %c0_2] : memref<64x1xf32, #tpu.memory_space<vmem>>, vector<64x1xf32>
    %c0_3 = arith.constant 0 : index
    %c0_4 = arith.constant 0 : index
    %2 = vector.load %arg5[%c0_3, %c0_4] : memref<64x32xf32, #tpu.memory_space<vmem>>, vector<64x32xf32>
    %c0_5 = arith.constant 0 : index
    %c0_6 = arith.constant 0 : index
    %3 = vector.load %arg6[%c0_5, %c0_6] : memref<64x1xf32, #tpu.memory_space<vmem>>, vector<64x1xf32>
    %c0_7 = arith.constant 0 : index
    %c0_8 = arith.constant 0 : index
    %4 = vector.load %arg7[%c0_7, %c0_8] : memref<64x64xf32, #tpu.memory_space<vmem>>, vector<64x64xf32>
    %c0_9 = arith.constant 0 : index
    %c0_10 = arith.constant 0 : index
    %5 = vector.load %arg8[%c0_9, %c0_10] : memref<64x1xf32, #tpu.memory_space<vmem>>, vector<64x1xf32>
    %c0_11 = arith.constant 0 : index
    %c0_12 = arith.constant 0 : index
    %c0_13 = arith.constant 0 : index
    %6 = vector.load %arg1[%c0_11, %c0_12, %c0_13] : memref<2x32x64xf32, #tpu.memory_space<vmem>>, vector<1x32x64xf32>
    %7 = vector.shape_cast %6 : vector<1x32x64xf32> to vector<32x64xf32>
    %c0_14 = arith.constant 0 : index
    %c0_15 = arith.constant 0 : index
    %c0_16 = arith.constant 0 : index
    %8 = vector.load %arg2[%c0_14, %c0_15, %c0_16] : memref<2x32x256xf32, #tpu.memory_space<vmem>>, vector<1x32x256xf32>
    %9 = vector.shape_cast %8 : vector<1x32x256xf32> to vector<32x256xf32>
    %cst = arith.constant dense<0.000000e+00> : vector<64x256xf32>
    %10 = tpu.matmul %0, %9, %cst {dimension_numbers = #tpu.dot_dimension_numbers<[1], [0], [0], [1], [0, 0, 1, 1], [], []>} : vector<64x32xf32>, vector<32x256xf32>, vector<64x256xf32> -> vector<64x256xf32>
    %11 = vector.broadcast %1 : vector<64x1xf32> to vector<64x256xf32>
    %12 = arith.addf %10, %11 : vector<64x256xf32>
    %cst_17 = arith.constant dense<0.000000e+00> : vector<64x64xf32>
    %13 = tpu.matmul %2, %7, %cst_17 {dimension_numbers = #tpu.dot_dimension_numbers<[1], [0], [0], [1], [0, 0, 1, 1], [], []>} : vector<64x32xf32>, vector<32x64xf32>, vector<64x64xf32> -> vector<64x64xf32>
    %14 = vector.broadcast %3 : vector<64x1xf32> to vector<64x64xf32>
    %15 = arith.addf %13, %14 : vector<64x64xf32>
    %16 = vector.extract_strided_slice %12 {offsets = [0, 0], sizes = [32, 256], strides = [1, 1]} : vector<64x256xf32> to vector<32x256xf32>
    %17 = vector.extract_strided_slice %12 {offsets = [32, 0], sizes = [32, 256], strides = [1, 1]} : vector<64x256xf32> to vector<32x256xf32>
    %cst_18 = arith.constant 0.000000e+00 : f32
    %18 = vector.broadcast %cst_18 : f32 to vector<32x256xf32>
    %19 = arith.maximumf %17, %18 : vector<32x256xf32>
    %20 = vector.extract_strided_slice %15 {offsets = [0, 0], sizes = [32, 64], strides = [1, 1]} : vector<64x64xf32> to vector<32x64xf32>
    %21 = vector.extract_strided_slice %15 {offsets = [32, 0], sizes = [32, 64], strides = [1, 1]} : vector<64x64xf32> to vector<32x64xf32>
    %cst_19 = arith.constant 0.000000e+00 : f32
    %22 = vector.broadcast %cst_19 : f32 to vector<32x64xf32>
    %23 = arith.maximumf %21, %22 : vector<32x64xf32>
    %cst_20 = arith.constant dense<0.000000e+00> : vector<64x256xf32>
    %24 = tpu.matmul %20, %16, %cst_20 {dimension_numbers = #tpu.dot_dimension_numbers<[0], [0], [1], [1], [0, 1, 1, 1], [], []>} : vector<32x64xf32>, vector<32x256xf32>, vector<64x256xf32> -> vector<64x256xf32>
    %cst_21 = arith.constant dense<0xFF800000> : vector<256xf32>
    %25 = vector.multi_reduction <maximumf>, %24, %cst_21 [0] : vector<64x256xf32> to vector<256xf32>
    %26 = vector.shape_cast %25 : vector<256xf32> to vector<1x256xf32>
    %27 = vector.broadcast %26 : vector<1x256xf32> to vector<64x256xf32>
    %28 = arith.subf %24, %27 : vector<64x256xf32>
    %29 = math.exp %28 : vector<64x256xf32>
    %cst_22 = arith.constant dense<0.000000e+00> : vector<256xf32>
    %30 = vector.multi_reduction <add>, %29, %cst_22 [0] : vector<64x256xf32> to vector<256xf32>
    %31 = vector.shape_cast %30 : vector<256xf32> to vector<1x256xf32>
    %32 = tpu.reciprocal %31 : vector<1x256xf32> -> vector<1x256xf32>
    %33 = vector.broadcast %32 : vector<1x256xf32> to vector<64x256xf32>
    %34 = arith.mulf %29, %33 : vector<64x256xf32>
    %cst_23 = arith.constant dense<0.000000e+00> : vector<32x256xf32>
    %35 = tpu.matmul %23, %34, %cst_23 {dimension_numbers = #tpu.dot_dimension_numbers<[1], [0], [0], [1], [0, 0, 1, 1], [], []>} : vector<32x64xf32>, vector<64x256xf32>, vector<32x256xf32> -> vector<32x256xf32>
    %36 = tpu.concatenate %35, %19 in 0 : vector<32x256xf32>, vector<32x256xf32> -> vector<64x256xf32>
    %cst_24 = arith.constant dense<0.000000e+00> : vector<64x256xf32>
    %37 = tpu.matmul %4, %36, %cst_24 {dimension_numbers = #tpu.dot_dimension_numbers<[1], [0], [0], [1], [0, 0, 1, 1], [], []>} : vector<64x64xf32>, vector<64x256xf32>, vector<64x256xf32> -> vector<64x256xf32>
    %38 = vector.broadcast %5 : vector<64x1xf32> to vector<64x256xf32>
    %39 = arith.addf %37, %38 : vector<64x256xf32>
    %cst_25 = arith.constant 0.000000e+00 : f32
    %40 = vector.broadcast %cst_25 : f32 to vector<64x256xf32>
    %41 = arith.maximumf %39, %40 : vector<64x256xf32>
    %c0_26 = arith.constant 0 : index
    %c0_27 = arith.constant 0 : index
    %c0_28 = arith.constant 0 : index
    %42 = vector.load %arg9[%c0_26, %c0_27, %c0_28] : memref<2x64x256xf32, #tpu.memory_space<vmem>>, vector<1x64x256xf32>
    %43 = vector.shape_cast %42 : vector<1x64x256xf32> to vector<64x256xf32>
    %44 = vector.shape_cast %41 : vector<64x256xf32> to vector<1x64x256xf32>
    tpu.vector_store %arg9[%c0_26, %c0_27, %c0_28], %44 {strides = array<i32>} : memref<2x64x256xf32, #tpu.memory_space<vmem>>, vector<1x64x256xf32>,
    %c1 = arith.constant 1 : index
    %c0_29 = arith.constant 0 : index
    %c0_30 = arith.constant 0 : index
    %45 = vector.load %arg1[%c1, %c0_29, %c0_30] : memref<2x32x64xf32, #tpu.memory_space<vmem>>, vector<1x32x64xf32>
    %46 = vector.shape_cast %45 : vector<1x32x64xf32> to vector<32x64xf32>
    %c1_31 = arith.constant 1 : index
    %c0_32 = arith.constant 0 : index
    %c0_33 = arith.constant 0 : index
    %47 = vector.load %arg2[%c1_31, %c0_32, %c0_33] : memref<2x32x256xf32, #tpu.memory_space<vmem>>, vector<1x32x256xf32>
    %48 = vector.shape_cast %47 : vector<1x32x256xf32> to vector<32x256xf32>
    %cst_34 = arith.constant dense<0.000000e+00> : vector<64x256xf32>
    %49 = tpu.matmul %0, %48, %cst_34 {dimension_numbers = #tpu.dot_dimension_numbers<[1], [0], [0], [1], [0, 0, 1, 1], [], []>} : vector<64x32xf32>, vector<32x256xf32>, vector<64x256xf32> -> vector<64x256xf32>
    %50 = vector.broadcast %1 : vector<64x1xf32> to vector<64x256xf32>
    %51 = arith.addf %49, %50 : vector<64x256xf32>
    %cst_35 = arith.constant dense<0.000000e+00> : vector<64x64xf32>
    %52 = tpu.matmul %2, %46, %cst_35 {dimension_numbers = #tpu.dot_dimension_numbers<[1], [0], [0], [1], [0, 0, 1, 1], [], []>} : vector<64x32xf32>, vector<32x64xf32>, vector<64x64xf32> -> vector<64x64xf32>
    %53 = vector.broadcast %3 : vector<64x1xf32> to vector<64x64xf32>
    %54 = arith.addf %52, %53 : vector<64x64xf32>
    %55 = vector.extract_strided_slice %51 {offsets = [0, 0], sizes = [32, 256], strides = [1, 1]} : vector<64x256xf32> to vector<32x256xf32>
    %56 = vector.extract_strided_slice %51 {offsets = [32, 0], sizes = [32, 256], strides = [1, 1]} : vector<64x256xf32> to vector<32x256xf32>
    %cst_36 = arith.constant 0.000000e+00 : f32
    %57 = vector.broadcast %cst_36 : f32 to vector<32x256xf32>
    %58 = arith.maximumf %56, %57 : vector<32x256xf32>
    %59 = vector.extract_strided_slice %54 {offsets = [0, 0], sizes = [32, 64], strides = [1, 1]} : vector<64x64xf32> to vector<32x64xf32>
    %60 = vector.extract_strided_slice %54 {offsets = [32, 0], sizes = [32, 64], strides = [1, 1]} : vector<64x64xf32> to vector<32x64xf32>
    %cst_37 = arith.constant 0.000000e+00 : f32
    %61 = vector.broadcast %cst_37 : f32 to vector<32x64xf32>
    %62 = arith.maximumf %60, %61 : vector<32x64xf32>
    %cst_38 = arith.constant dense<0.000000e+00> : vector<64x256xf32>
    %63 = tpu.matmul %59, %55, %cst_38 {dimension_numbers = #tpu.dot_dimension_numbers<[0], [0], [1], [1], [0, 1, 1, 1], [], []>} : vector<32x64xf32>, vector<32x256xf32>, vector<64x256xf32> -> vector<64x256xf32>
    %cst_39 = arith.constant dense<0xFF800000> : vector<256xf32>
    %64 = vector.multi_reduction <maximumf>, %63, %cst_39 [0] : vector<64x256xf32> to vector<256xf32>
    %65 = vector.shape_cast %64 : vector<256xf32> to vector<1x256xf32>
    %66 = vector.broadcast %65 : vector<1x256xf32> to vector<64x256xf32>
    %67 = arith.subf %63, %66 : vector<64x256xf32>
    %68 = math.exp %67 : vector<64x256xf32>
    %cst_40 = arith.constant dense<0.000000e+00> : vector<256xf32>
    %69 = vector.multi_reduction <add>, %68, %cst_40 [0] : vector<64x256xf32> to vector<256xf32>
    %70 = vector.shape_cast %69 : vector<256xf32> to vector<1x256xf32>
    %71 = tpu.reciprocal %70 : vector<1x256xf32> -> vector<1x256xf32>
    %72 = vector.broadcast %71 : vector<1x256xf32> to vector<64x256xf32>
    %73 = arith.mulf %68, %72 : vector<64x256xf32>
    %cst_41 = arith.constant dense<0.000000e+00> : vector<32x256xf32>
    %74 = tpu.matmul %62, %73, %cst_41 {dimension_numbers = #tpu.dot_dimension_numbers<[1], [0], [0], [1], [0, 0, 1, 1], [], []>} : vector<32x64xf32>, vector<64x256xf32>, vector<32x256xf32> -> vector<32x256xf32>
    %75 = tpu.concatenate %74, %58 in 0 : vector<32x256xf32>, vector<32x256xf32> -> vector<64x256xf32>
    %cst_42 = arith.constant dense<0.000000e+00> : vector<64x256xf32>
    %76 = tpu.matmul %4, %75, %cst_42 {dimension_numbers = #tpu.dot_dimension_numbers<[1], [0], [0], [1], [0, 0, 1, 1], [], []>} : vector<64x64xf32>, vector<64x256xf32>, vector<64x256xf32> -> vector<64x256xf32>
    %77 = vector.broadcast %5 : vector<64x1xf32> to vector<64x256xf32>
    %78 = arith.addf %76, %77 : vector<64x256xf32>
    %cst_43 = arith.constant 0.000000e+00 : f32
    %79 = vector.broadcast %cst_43 : f32 to vector<64x256xf32>
    %80 = arith.maximumf %78, %79 : vector<64x256xf32>
    %c1_44 = arith.constant 1 : index
    %c0_45 = arith.constant 0 : index
    %c0_46 = arith.constant 0 : index
    %81 = vector.load %arg9[%c1_44, %c0_45, %c0_46] : memref<2x64x256xf32, #tpu.memory_space<vmem>>, vector<1x64x256xf32>
    %82 = vector.shape_cast %81 : vector<1x64x256xf32> to vector<64x256xf32>
    %83 = vector.shape_cast %80 : vector<64x256xf32> to vector<1x64x256xf32>
    tpu.vector_store %arg9[%c1_44, %c0_45, %c0_46], %83 {strides = array<i32>} : memref<2x64x256xf32, #tpu.memory_space<vmem>>, vector<1x64x256xf32>,
    return
  }
  func.func @transform_0(%arg0: i32) -> (i32, i32, i32) {
    %c0_i32 = arith.constant 0 : i32
    %c0_i32_0 = arith.constant 0 : i32
    %c0_i32_1 = arith.constant 0 : i32
    return %arg0, %c0_i32, %c0_i32_0 : i32, i32, i32
  }
  func.func @transform_1(%arg0: i32) -> (i32, i32, i32) {
    %c0_i32 = arith.constant 0 : i32
    %c0_i32_0 = arith.constant 0 : i32
    %c0_i32_1 = arith.constant 0 : i32
    return %arg0, %c0_i32, %c0_i32_0 : i32, i32, i32
  }
  func.func @transform_2(%arg0: i32) -> (i32, i32) {
    %c0_i32 = arith.constant 0 : i32
    %c0_i32_0 = arith.constant 0 : i32
    %c0_i32_1 = arith.constant 0 : i32
    return %c0_i32, %c0_i32_0 : i32, i32
  }
  func.func @transform_3(%arg0: i32) -> (i32, i32) {
    %c0_i32 = arith.constant 0 : i32
    %c0_i32_0 = arith.constant 0 : i32
    %c0_i32_1 = arith.constant 0 : i32
    return %c0_i32, %c0_i32_0 : i32, i32
  }
  func.func @transform_4(%arg0: i32) -> (i32, i32) {
    %c0_i32 = arith.constant 0 : i32
    %c0_i32_0 = arith.constant 0 : i32
    %c0_i32_1 = arith.constant 0 : i32
    return %c0_i32, %c0_i32_0 : i32, i32
  }
  func.func @transform_5(%arg0: i32) -> (i32, i32) {
    %c0_i32 = arith.constant 0 : i32
    %c0_i32_0 = arith.constant 0 : i32
    %c0_i32_1 = arith.constant 0 : i32
    return %c0_i32, %c0_i32_0 : i32, i32
  }
  func.func @transform_6(%arg0: i32) -> (i32, i32) {
    %c0_i32 = arith.constant 0 : i32
    %c0_i32_0 = arith.constant 0 : i32
    %c0_i32_1 = arith.constant 0 : i32
    return %c0_i32, %c0_i32_0 : i32, i32
  }
  func.func @transform_7(%arg0: i32) -> (i32, i32) {
    %c0_i32 = arith.constant 0 : i32
    %c0_i32_0 = arith.constant 0 : i32
    %c0_i32_1 = arith.constant 0 : i32
    return %c0_i32, %c0_i32_0 : i32, i32
  }
  func.func @transform_8(%arg0: i32) -> (i32, i32, i32) {
    %c0_i32 = arith.constant 0 : i32
    %c0_i32_0 = arith.constant 0 : i32
    %c0_i32_1 = arith.constant 0 : i32
    return %arg0, %c0_i32, %c0_i32_0 : i32, i32, i32
  }
}

</mosaic_0001>

<llo_original>
// kernel: tpu_custom_call.1
$region0: #{tpu_custom_call.1}
  #allocation0 [shape = 'u32[]', space=smem, size = 0x4, offset = 0x4, fixed_abs, tag = 'smem constant byte address 0x4 - core index']
  #allocation1 [shape = 'u32[144,128]{1,0:T(1,128)}', space=vmem, size = 0x12000, scoped, tag = 'internal scratch']
  %s0 = inlined_call_operand.vmem [shape: f32[2,32,64], index: 0, kind: input, shape index: {}]
  %s1 = inlined_call_operand.vmem [shape: f32[2,32,256], index: 1, kind: input, shape index: {}]
  %s2 = inlined_call_operand.vmem [shape: f32[64,32], index: 2, kind: input, shape index: {}]
  %s3 = inlined_call_operand.vmem [shape: f32[64,1], index: 3, kind: input, shape index: {}]
  %s4 = inlined_call_operand.vmem [shape: f32[64,32], index: 4, kind: input, shape index: {}]
  %s5 = inlined_call_operand.vmem [shape: f32[64,1], index: 5, kind: input, shape index: {}]
  %s6 = inlined_call_operand.vmem [shape: f32[64,64], index: 6, kind: input, shape index: {}]
  %s7 = inlined_call_operand.vmem [shape: f32[64,1], index: 7, kind: input, shape index: {}]
  %s8 = inlined_call_operand.hbm [shape: f32[2,64,256], index: 8, kind: output, shape index: {}]
  %s9 = sld [smem:[#allocation0]]
  $region42: #{tpu_custom_call.1} parent=0
    _
  %s11 = ssub.s32 1, %s9
  %s12 = scalar_select 0, %s11, %s9
  $region1: #{tpu_custom_call.1} parent=0
    #allocation2 [shape = 'u8[131072]{0}', space=vmem, size = 0x20000, scoped, tag = 'output window, operand 0, single buffered']
    #allocation3 [shape = 's32[1]{0}', space=sflag, size = 0x4, scoped, tag = 'scoped memory for tpu_custom_call.1']
    %13 = vsyncpa [#allocation3], 0
    // Predicated region
    $region2: #{tpu_custom_call.1} parent=1 // pred_check
      _
    $region3: #{tpu_custom_call.1} parent=1 // pred_check_branch
      %15 = sbr.rel (0) target = $region5
    $region4: #{tpu_custom_call.1} parent=1 // pred_region
      _
    $region5: #{tpu_custom_call.1} parent=1 // pred_fallthru
      _
    // Predicated region
    $region6: #{tpu_custom_call.1} parent=1 // pred_check
      _
    $region7: #{tpu_custom_call.1} parent=1 // pred_check_branch
      %17 = sbr.rel (0) target = $region9
    $region8: #{tpu_custom_call.1} parent=1 // pred_region
      _
    $region9: #{tpu_custom_call.1} parent=1 // pred_fallthru
      _
    // Predicated region
    $region10: #{tpu_custom_call.1} parent=1 // pred_check
      _
    $region11: #{tpu_custom_call.1} parent=1 // pred_check_branch
      %19 = sbr.rel (0) target = $region13
    $region12: #{tpu_custom_call.1} parent=1 // pred_region
      _
    $region13: #{tpu_custom_call.1} parent=1 // pred_fallthru
      _
    // Predicated region
    $region14: #{tpu_custom_call.1} parent=1 // pred_check
      _
    $region15: #{tpu_custom_call.1} parent=1 // pred_check_branch
      %21 = sbr.rel (0) target = $region17
    $region16: #{tpu_custom_call.1} parent=1 // pred_region
      _
    $region17: #{tpu_custom_call.1} parent=1 // pred_fallthru
      _
    // Predicated region
    $region18: #{tpu_custom_call.1} parent=1 // pred_check
      _
    $region19: #{tpu_custom_call.1} parent=1 // pred_check_branch
      %23 = sbr.rel (0) target = $region21
    $region20: #{tpu_custom_call.1} parent=1 // pred_region
      _
    $region21: #{tpu_custom_call.1} parent=1 // pred_fallthru
      _
    // Predicated region
    $region22: #{tpu_custom_call.1} parent=1 // pred_check
      _
    $region23: #{tpu_custom_call.1} parent=1 // pred_check_branch
      %25 = sbr.rel (0) target = $region25
    $region24: #{tpu_custom_call.1} parent=1 // pred_region
      _
    $region25: #{tpu_custom_call.1} parent=1 // pred_fallthru
      _
    // Predicated region
    $region26: #{tpu_custom_call.1} parent=1 // pred_check
      _
    $region27: #{tpu_custom_call.1} parent=1 // pred_check_branch
      %27 = sbr.rel (0) target = $region29
    $region28: #{tpu_custom_call.1} parent=1 // pred_region
      _
    $region29: #{tpu_custom_call.1} parent=1 // pred_fallthru
      _
    // Predicated region
    $region30: #{tpu_custom_call.1} parent=1 // pred_check
      _
    $region31: #{tpu_custom_call.1} parent=1 // pred_check_branch
      %29 = sbr.rel (0) target = $region33
    $region32: #{tpu_custom_call.1} parent=1 // pred_region
      _
    $region33: #{tpu_custom_call.1} parent=1 // pred_fallthru
      _
    %v30 = vld [vmem:[%s2] sm:$0xff]
    %v31 = vld [vmem:[%s2 + $0x8] sm:$0xff]
    %v32 = vld [vmem:[%s2 + $0x10] sm:$0xff]
    %v33 = vld [vmem:[%s2 + $0x18] sm:$0xff]
    %v34 = vld [vmem:[%s2 + $0x20] sm:$0xff]
    %v35 = vld [vmem:[%s2 + $0x28] sm:$0xff]
    %v36 = vld [vmem:[%s2 + $0x30] sm:$0xff]
    %v37 = vld [vmem:[%s2 + $0x38] sm:$0xff]
    %v38 = vld [vmem:[%s3] sm:$0xff]
    %v39 = vld [vmem:[%s3 + $0x8] sm:$0xff]
    %v40 = vld [vmem:[%s3 + $0x10] sm:$0xff]
    %v41 = vld [vmem:[%s3 + $0x18] sm:$0xff]
    %v42 = vld [vmem:[%s3 + $0x20] sm:$0xff]
    %v43 = vld [vmem:[%s3 + $0x28] sm:$0xff]
    %v44 = vld [vmem:[%s3 + $0x30] sm:$0xff]
    %v45 = vld [vmem:[%s3 + $0x38] sm:$0xff]
    %v46 = vld [vmem:[%s4] sm:$0xff]
    %v47 = vld [vmem:[%s4 + $0x8] sm:$0xff]
    %v48 = vld [vmem:[%s4 + $0x10] sm:$0xff]
    %v49 = vld [vmem:[%s4 + $0x18] sm:$0xff]
    %v50 = vld [vmem:[%s4 + $0x20] sm:$0xff]
    %v51 = vld [vmem:[%s4 + $0x28] sm:$0xff]
    %v52 = vld [vmem:[%s4 + $0x30] sm:$0xff]
    %v53 = vld [vmem:[%s4 + $0x38] sm:$0xff]
    %v54 = vld [vmem:[%s5] sm:$0xff]
    %v55 = vld [vmem:[%s5 + $0x8] sm:$0xff]
    %v56 = vld [vmem:[%s5 + $0x10] sm:$0xff]
    %v57 = vld [vmem:[%s5 + $0x18] sm:$0xff]
    %v58 = vld [vmem:[%s5 + $0x20] sm:$0xff]
    %v59 = vld [vmem:[%s5 + $0x28] sm:$0xff]
    %v60 = vld [vmem:[%s5 + $0x30] sm:$0xff]
    %v61 = vld [vmem:[%s5 + $0x38] sm:$0xff]
    %v62 = vld [vmem:[%s6] sm:$0xff]
    %v63 = vld [vmem:[%s6 + $0x8] sm:$0xff]
    %v64 = vld [vmem:[%s6 + $0x10] sm:$0xff]
    %v65 = vld [vmem:[%s6 + $0x18] sm:$0xff]
    %v66 = vld [vmem:[%s6 + $0x20] sm:$0xff]
    %v67 = vld [vmem:[%s6 + $0x28] sm:$0xff]
    %v68 = vld [vmem:[%s6 + $0x30] sm:$0xff]
    %v69 = vld [vmem:[%s6 + $0x38] sm:$0xff]
    %v70 = vld [vmem:[%s7] sm:$0xff]
    %v71 = vld [vmem:[%s7 + $0x8] sm:$0xff]
    %v72 = vld [vmem:[%s7 + $0x10] sm:$0xff]
    %v73 = vld [vmem:[%s7 + $0x18] sm:$0xff]
    %v74 = vld [vmem:[%s7 + $0x20] sm:$0xff]
    %v75 = vld [vmem:[%s7 + $0x28] sm:$0xff]
    %v76 = vld [vmem:[%s7 + $0x30] sm:$0xff]
    %v77 = vld [vmem:[%s7 + $0x38] sm:$0xff]
    %v78 = vld [vmem:[%s0] sm:$0xff]
    %v79 = vld [vmem:[%s0 + $0x8] sm:$0xff]
    %v80 = vld [vmem:[%s0 + $0x10] sm:$0xff]
    %v81 = vld [vmem:[%s0 + $0x18] sm:$0xff]
    %v82 = vld [vmem:[%s1] sm:$0xff]
    %v83 = vld [vmem:[%s1 + $0x8] sm:$0xff]
    %v84 = vld [vmem:[%s1 + $0x10] sm:$0xff]
    %v85 = vld [vmem:[%s1 + $0x18] sm:$0xff]
    %v86 = vld [vmem:[%s1 + $0x20] sm:$0xff]
    %v87 = vld [vmem:[%s1 + $0x28] sm:$0xff]
    %v88 = vld [vmem:[%s1 + $0x30] sm:$0xff]
    %v89 = vld [vmem:[%s1 + $0x38] sm:$0xff]
    %91 = vset.pattern.permute.xlu0 0
    %92 = vperm.xlu0 %91, %v38
    %v93 = vpop.permute.xlu0 %92
    %96 = vset.pattern.permute.xlu0 0
    %97 = vperm.xlu0 %96, %v39
    %v98 = vpop.permute.xlu0 %97
    %101 = vset.pattern.permute.xlu0 0
    %102 = vperm.xlu0 %101, %v40
    %v103 = vpop.permute.xlu0 %102
    %106 = vset.pattern.permute.xlu0 0
    %107 = vperm.xlu0 %106, %v41
    %v108 = vpop.permute.xlu0 %107
    %111 = vset.pattern.permute.xlu0 0
    %112 = vperm.xlu0 %111, %v42
    %v113 = vpop.permute.xlu0 %112
    %116 = vset.pattern.permute.xlu0 0
    %117 = vperm.xlu0 %116, %v43
    %v118 = vpop.permute.xlu0 %117
    %121 = vset.pattern.permute.xlu0 0
    %122 = vperm.xlu0 %121, %v44
    %v123 = vpop.permute.xlu0 %122
    %126 = vset.pattern.permute.xlu0 0
    %127 = vperm.xlu0 %126, %v45
    %v128 = vpop.permute.xlu0 %127
    %vm130 = vcmask 261120
    %v132 = vsel %vm130, %v30, 0
    %v135 = vsel %vm130, %v31, 0
    %v138 = vsel %vm130, %v32, 0
    %v141 = vsel %vm130, %v33, 0
    %v144 = vsel %vm130, %v34, 0
    %v147 = vsel %vm130, %v35, 0
    %v150 = vsel %vm130, %v36, 0
    %v153 = vsel %vm130, %v37, 0
    %155 = vmatprep.subr.mxu0 0.0
    %156 = vmatpush1.msra.mxu0 0.0
    %157 = vmatprep.subr.mxu0 0.0
    %158 = vmatpush1.msra.mxu0 0.0
    %159 = vmatprep.subr.mxu0 0.0
    %160 = vmatpush1.msra.mxu0 0.0
    %161 = vmatprep.subr.mxu0 0.0
    %162 = vmatpush1.msra.mxu0 0.0
    %163 = vmatprep.subr.mxu0 0.0
    %164 = vmatpush1.msra.mxu0 0.0
    %165 = vmatprep.subr.mxu0 0.0
    %166 = vmatpush1.msra.mxu0 0.0
    %167 = vmatprep.subr.mxu0 0.0
    %168 = vmatpush1.msra.mxu0 0.0
    %169 = vmatprep.subr.mxu0 0.0
    %170 = vmatpush1.msra.mxu0 0.0
    %171 = vmatprep.subr.mxu0 0.0
    %172 = vmatpush1.msra.mxu0 0.0
    %173 = vmatprep.subr.mxu0 0.0
    %174 = vmatpush1.msra.mxu0 0.0
    %175 = vmatprep.subr.mxu0 0.0
    %176 = vmatpush1.msra.mxu0 0.0
    %177 = vmatprep.subr.mxu0 0.0
    %178 = vmatpush1.msra.mxu0 0.0
    %179 = vmatprep.subr.mxu0 %v89
    %180 = vmatpush1.msra.mxu0 %v88
    %181 = vmatprep.subr.mxu0 %v87
    %182 = vmatpush1.msra.mxu0 %v86
    %183 = vmatprep.subr.mxu0 %v85
    %184 = vmatpush1.msra.mxu0 %v84
    %185 = vmatprep.subr.mxu0 %v83
    %186 = vmatpush1.msra.mxu0 %v82
    %187 = vmatprep.subr.mxu0 0.0
    %188 = vmatpush2.msra.mxu0 0.0
    %189 = vmatprep.subr.mxu0 0.0
    %190 = vmatpush2.msra.mxu0 0.0
    %191 = vmatprep.subr.mxu0 0.0
    %192 = vmatpush2.msra.mxu0 0.0
    %193 = vmatprep.subr.mxu0 0.0
    %194 = vmatpush2.msra.mxu0 0.0
    %195 = vmatprep.subr.mxu0 0.0
    %196 = vmatpush2.msra.mxu0 0.0
    %197 = vmatprep.subr.mxu0 0.0
    %198 = vmatpush2.msra.mxu0 0.0
    %199 = vmatprep.subr.mxu0 0.0
    %200 = vmatpush2.msra.mxu0 0.0
    %201 = vmatprep.subr.mxu0 0.0
    %202 = vmatpush2.msra.mxu0 0.0
    %203 = vmatprep.subr.mxu0 0.0
    %204 = vmatpush2.msra.mxu0 0.0
    %205 = vmatprep.subr.mxu0 0.0
    %206 = vmatpush2.msra.mxu0 0.0
    %207 = vmatprep.subr.mxu0 0.0
    %208 = vmatpush2.msra.mxu0 0.0
    %209 = vmatprep.subr.mxu0 0.0
    %210 = vmatpush2.msra.mxu0 0.0
    %211 = vmatprep.subr.mxu0 0.0
    %212 = vmatpush2.msra.mxu0 0.0
    %213 = vmatprep.subr.mxu0 0.0
    %214 = vmatpush2.msra.mxu0 0.0
    %215 = vmatprep.subr.mxu0 0.0
    %216 = vmatpush2.msra.mxu0 0.0
    %217 = vmatprep.subr.mxu0 0.0
    %218 = vmatpush2.msra.mxu0 0.0
    %219 = vmatprep.mubr.f32.mxu0 0.0
    %220 = vmatmul.mubr.f32.gmra.mxu0 %v132
    %v221 = vpop.f32.mrf.mxu0
    %v222 = vadd.f32 %v93, %v221
    %v223 = vpop.f32.mrf.mxu0
    %v224 = vadd.f32 %v93, %v223
    %225 = vmatprep.mubr.f32.mxu0 0.0
    %226 = vmatmul.mubr.f32.gmra.mxu0 %v135
    %v227 = vpop.f32.mrf.mxu0
    %v228 = vadd.f32 %v98, %v227
    %v229 = vpop.f32.mrf.mxu0
    %v230 = vadd.f32 %v98, %v229
    %231 = vmatprep.mubr.f32.mxu0 0.0
    %232 = vmatmul.mubr.f32.gmra.mxu0 %v138
    %v233 = vpop.f32.mrf.mxu0
    %v234 = vadd.f32 %v103, %v233
    %v235 = vpop.f32.mrf.mxu0
    %v236 = vadd.f32 %v103, %v235
    %237 = vmatprep.mubr.f32.mxu0 0.0
    %238 = vmatmul.mubr.f32.gmra.mxu0 %v141
    %v239 = vpop.f32.mrf.mxu0
    %v240 = vadd.f32 %v108, %v239
    %v241 = vpop.f32.mrf.mxu0
    %v242 = vadd.f32 %v108, %v241
    %243 = vmatprep.mubr.f32.mxu0 0.0
    %244 = vmatmul.mubr.f32.gmra.mxu0 %v144
    %v245 = vpop.f32.mrf.mxu0
    %v246 = vadd.f32 %v113, %v245
    %v247 = vpop.f32.mrf.mxu0
    %v248 = vadd.f32 %v113, %v247
    %249 = vmatprep.mubr.f32.mxu0 0.0
    %250 = vmatmul.mubr.f32.gmra.mxu0 %v147
    %v251 = vpop.f32.mrf.mxu0
    %v252 = vadd.f32 %v118, %v251
    %v253 = vpop.f32.mrf.mxu0
    %v254 = vadd.f32 %v118, %v253
    %255 = vmatprep.mubr.f32.mxu0 0.0
    %256 = vmatmul.mubr.f32.gmra.mxu0 %v150
    %v257 = vpop.f32.mrf.mxu0
    %v258 = vadd.f32 %v123, %v257
    %v259 = vpop.f32.mrf.mxu0
    %v260 = vadd.f32 %v123, %v259
    %261 = vmatprep.mubr.f32.mxu0 0.0
    %262 = vmatmul.mubr.f32.gmra.mxu0 %v153
    %v263 = vpop.f32.mrf.mxu0
    %v264 = vadd.f32 %v128, %v263
    %v265 = vpop.f32.mrf.mxu0
    %v266 = vadd.f32 %v128, %v265
    %267 = vdwg.mxu0
    %269 = vset.pattern.permute.xlu0 0
    %270 = vperm.xlu0 %269, %v54
    %v271 = vpop.permute.xlu0 %270
    %274 = vset.pattern.permute.xlu0 0
    %275 = vperm.xlu0 %274, %v55
    %v276 = vpop.permute.xlu0 %275
    %279 = vset.pattern.permute.xlu0 0
    %280 = vperm.xlu0 %279, %v56
    %v281 = vpop.permute.xlu0 %280
    %284 = vset.pattern.permute.xlu0 0
    %285 = vperm.xlu0 %284, %v57
    %v286 = vpop.permute.xlu0 %285
    %289 = vset.pattern.permute.xlu0 0
    %290 = vperm.xlu0 %289, %v58
    %v291 = vpop.permute.xlu0 %290
    %294 = vset.pattern.permute.xlu0 0
    %295 = vperm.xlu0 %294, %v59
    %v296 = vpop.permute.xlu0 %295
    %299 = vset.pattern.permute.xlu0 0
    %300 = vperm.xlu0 %299, %v60
    %v301 = vpop.permute.xlu0 %300
    %304 = vset.pattern.permute.xlu0 0
    %305 = vperm.xlu0 %304, %v61
    %v306 = vpop.permute.xlu0 %305
    %v309 = vsel %vm130, %v46, 0
    %v312 = vsel %vm130, %v47, 0
    %v315 = vsel %vm130, %v48, 0
    %v318 = vsel %vm130, %v49, 0
    %v321 = vsel %vm130, %v50, 0
    %v324 = vsel %vm130, %v51, 0
    %v327 = vsel %vm130, %v52, 0
    %v330 = vsel %vm130, %v53, 0
    %332 = vmatprep.subr.mxu0 0.0
    %333 = vmatpush1.msra.mxu0 0.0
    %334 = vmatprep.subr.mxu0 0.0
    %335 = vmatpush1.msra.mxu0 0.0
    %336 = vmatprep.subr.mxu0 0.0
    %337 = vmatpush1.msra.mxu0 0.0
    %338 = vmatprep.subr.mxu0 0.0
    %339 = vmatpush1.msra.mxu0 0.0
    %340 = vmatprep.subr.mxu0 0.0
    %341 = vmatpush1.msra.mxu0 0.0
    %342 = vmatprep.subr.mxu0 0.0
    %343 = vmatpush1.msra.mxu0 0.0
    %344 = vmatprep.subr.mxu0 0.0
    %345 = vmatpush1.msra.mxu0 0.0
    %346 = vmatprep.subr.mxu0 0.0
    %347 = vmatpush1.msra.mxu0 0.0
    %348 = vmatprep.subr.mxu0 0.0
    %349 = vmatpush1.msra.mxu0 0.0
    %350 = vmatprep.subr.mxu0 0.0
    %351 = vmatpush1.msra.mxu0 0.0
    %352 = vmatprep.subr.mxu0 0.0
    %353 = vmatpush1.msra.mxu0 0.0
    %354 = vmatprep.subr.mxu0 0.0
    %355 = vmatpush1.msra.mxu0 0.0
    %356 = vmatprep.subr.mxu0 0.0
    %357 = vmatpush1.msra.mxu0 %v81
    %358 = vmatprep.subr.mxu0 0.0
    %359 = vmatpush1.msra.mxu0 %v80
    %360 = vmatprep.subr.mxu0 0.0
    %361 = vmatpush1.msra.mxu0 %v79
    %362 = vmatprep.subr.mxu0 0.0
    %363 = vmatpush1.msra.mxu0 %v78
    %364 = vmatprep.subr.mxu0 0.0
    %365 = vmatpush2.msra.mxu0 0.0
    %366 = vmatprep.subr.mxu0 0.0
    %367 = vmatpush2.msra.mxu0 0.0
    %368 = vmatprep.subr.mxu0 0.0
    %369 = vmatpush2.msra.mxu0 0.0
    %370 = vmatprep.subr.mxu0 0.0
    %371 = vmatpush2.msra.mxu0 0.0
    %372 = vmatprep.subr.mxu0 0.0
    %373 = vmatpush2.msra.mxu0 0.0
    %374 = vmatprep.subr.mxu0 0.0
    %375 = vmatpush2.msra.mxu0 0.0
    %376 = vmatprep.subr.mxu0 0.0
    %377 = vmatpush2.msra.mxu0 0.0
    %378 = vmatprep.subr.mxu0 0.0
    %379 = vmatpush2.msra.mxu0 0.0
    %380 = vmatprep.subr.mxu0 0.0
    %381 = vmatpush2.msra.mxu0 0.0
    %382 = vmatprep.subr.mxu0 0.0
    %383 = vmatpush2.msra.mxu0 0.0
    %384 = vmatprep.subr.mxu0 0.0
    %385 = vmatpush2.msra.mxu0 0.0
    %386 = vmatprep.subr.mxu0 0.0
    %387 = vmatpush2.msra.mxu0 0.0
    %388 = vmatprep.subr.mxu0 0.0
    %389 = vmatpush2.msra.mxu0 0.0
    %390 = vmatprep.subr.mxu0 0.0
    %391 = vmatpush2.msra.mxu0 0.0
    %392 = vmatprep.subr.mxu0 0.0
    %393 = vmatpush2.msra.mxu0 0.0
    %394 = vmatprep.subr.mxu0 0.0
    %395 = vmatpush2.msra.mxu0 0.0
    %396 = vmatprep.mubr.f32.mxu0 0.0
    %397 = vmatmul.mubr.f32.gmra.mxu0 %v309
    %v398 = vpop.f32.mrf.mxu0
    %v399 = vadd.f32 %v271, %v398
    %v400 = vpop.f32.mrf.mxu0
    %401 = vmatprep.mubr.f32.mxu0 0.0
    %402 = vmatmul.mubr.f32.gmra.mxu0 %v312
    %v403 = vpop.f32.mrf.mxu0
    %v404 = vadd.f32 %v276, %v403
    %v405 = vpop.f32.mrf.mxu0
    %406 = vmatprep.mubr.f32.mxu0 0.0
    %407 = vmatmul.mubr.f32.gmra.mxu0 %v315
    %v408 = vpop.f32.mrf.mxu0
    %v409 = vadd.f32 %v281, %v408
    %v410 = vpop.f32.mrf.mxu0
    %411 = vmatprep.mubr.f32.mxu0 0.0
    %412 = vmatmul.mubr.f32.gmra.mxu0 %v318
    %v413 = vpop.f32.mrf.mxu0
    %v414 = vadd.f32 %v286, %v413
    %v415 = vpop.f32.mrf.mxu0
    %416 = vmatprep.mubr.f32.mxu0 0.0
    %417 = vmatmul.mubr.f32.gmra.mxu0 %v321
    %v418 = vpop.f32.mrf.mxu0
    %v419 = vadd.f32 %v291, %v418
    %v420 = vpop.f32.mrf.mxu0
    %421 = vmatprep.mubr.f32.mxu0 0.0
    %422 = vmatmul.mubr.f32.gmra.mxu0 %v324
    %v423 = vpop.f32.mrf.mxu0
    %v424 = vadd.f32 %v296, %v423
    %v425 = vpop.f32.mrf.mxu0
    %426 = vmatprep.mubr.f32.mxu0 0.0
    %427 = vmatmul.mubr.f32.gmra.mxu0 %v327
    %v428 = vpop.f32.mrf.mxu0
    %v429 = vadd.f32 %v301, %v428
    %v430 = vpop.f32.mrf.mxu0
    %431 = vmatprep.mubr.f32.mxu0 0.0
    %432 = vmatmul.mubr.f32.gmra.mxu0 %v330
    %v433 = vpop.f32.mrf.mxu0
    %v434 = vadd.f32 %v306, %v433
    %v435 = vpop.f32.mrf.mxu0
    %436 = vdwg.mxu0
    %v437 = vmax.f32 %v246, 0.0
    %v438 = vmax.f32 %v248, 0.0
    %v439 = vmax.f32 %v252, 0.0
    %v440 = vmax.f32 %v254, 0.0
    %v441 = vmax.f32 %v258, 0.0
    %v442 = vmax.f32 %v260, 0.0
    %v443 = vmax.f32 %v264, 0.0
    %v444 = vmax.f32 %v266, 0.0
    %v445 = vmax.f32 %v419, 0.0
    %v446 = vmax.f32 %v424, 0.0
    %v447 = vmax.f32 %v429, 0.0
    %v448 = vmax.f32 %v434, 0.0
    %449 = vxpose.xlu0.b32.start [1/16] %v399, 128
    %450 = vxpose.xlu0.b32.cont [2/16] %v404, 128
    %451 = vxpose.xlu0.b32.cont [3/16] %v409, 128
    %452 = vxpose.xlu0.b32.cont [4/16] %v414, 128
    %453 = vxpose.xlu0.b32.cont [5/16] 0.0, 128
    %454 = vxpose.xlu0.b32.cont [6/16] 0.0, 128
    %455 = vxpose.xlu0.b32.cont [7/16] 0.0, 128
    %456 = vxpose.xlu0.b32.cont [8/16] 0.0, 128
    %457 = vxpose.xlu0.b32.cont [9/16] 0.0, 128
    %458 = vxpose.xlu0.b32.cont [10/16] 0.0, 128
    %459 = vxpose.xlu0.b32.cont [11/16] 0.0, 128
    %460 = vxpose.xlu0.b32.cont [12/16] 0.0, 128
    %461 = vxpose.xlu0.b32.cont [13/16] 0.0, 128
    %462 = vxpose.xlu0.b32.cont [14/16] 0.0, 128
    %463 = vxpose.xlu0.b32.cont [15/16] 0.0, 128
    %464 = vxpose.xlu0.b32.end [16/16] 0.0, 128
    %v465 = vpop.trf.xlu0
    %v466 = vpop.trf.xlu0
    %v467 = vpop.trf.xlu0
    %v468 = vpop.trf.xlu0
    %v469 = vpop.trf.xlu0
    %v470 = vpop.trf.xlu0
    %v471 = vpop.trf.xlu0
    %v472 = vpop.trf.xlu0
    %v473 = vpop.trf.xlu0
    %v474 = vpop.trf.xlu0
    %v475 = vpop.trf.xlu0
    %v476 = vpop.trf.xlu0
    %v477 = vpop.trf.xlu0
    %v478 = vpop.trf.xlu0
    %v479 = vpop.trf.xlu0
    %v480 = vpop.trf.xlu0
    %v482 = vsel %vm130, %v465, 0
    %v485 = vsel %vm130, %v466, 0
    %v488 = vsel %vm130, %v467, 0
    %v491 = vsel %vm130, %v468, 0
    %v494 = vsel %vm130, %v469, 0
    %v497 = vsel %vm130, %v470, 0
    %v500 = vsel %vm130, %v471, 0
    %v503 = vsel %vm130, %v472, 0
    %505 = vmatprep.subr.mxu0 0.0
    %506 = vmatpush1.msra.mxu0 0.0
    %507 = vmatprep.subr.mxu0 0.0
    %508 = vmatpush1.msra.mxu0 0.0
    %509 = vmatprep.subr.mxu0 0.0
    %510 = vmatpush1.msra.mxu0 0.0
    %511 = vmatprep.subr.mxu0 0.0
    %512 = vmatpush1.msra.mxu0 0.0
    %513 = vmatprep.subr.mxu0 0.0
    %514 = vmatpush1.msra.mxu0 0.0
    %515 = vmatprep.subr.mxu0 0.0
    %516 = vmatpush1.msra.mxu0 0.0
    %517 = vmatprep.subr.mxu0 0.0
    %518 = vmatpush1.msra.mxu0 0.0
    %519 = vmatprep.subr.mxu0 0.0
    %520 = vmatpush1.msra.mxu0 0.0
    %521 = vmatprep.subr.mxu0 0.0
    %522 = vmatpush1.msra.mxu0 0.0
    %523 = vmatprep.subr.mxu0 0.0
    %524 = vmatpush1.msra.mxu0 0.0
    %525 = vmatprep.subr.mxu0 0.0
    %526 = vmatpush1.msra.mxu0 0.0
    %527 = vmatprep.subr.mxu0 0.0
    %528 = vmatpush1.msra.mxu0 0.0
    %529 = vmatprep.subr.mxu0 %v242
    %530 = vmatpush1.msra.mxu0 %v240
    %531 = vmatprep.subr.mxu0 %v236
    %532 = vmatpush1.msra.mxu0 %v234
    %533 = vmatprep.subr.mxu0 %v230
    %534 = vmatpush1.msra.mxu0 %v228
    %535 = vmatprep.subr.mxu0 %v224
    %536 = vmatpush1.msra.mxu0 %v222
    %537 = vmatprep.subr.mxu0 0.0
    %538 = vmatpush2.msra.mxu0 0.0
    %539 = vmatprep.subr.mxu0 0.0
    %540 = vmatpush2.msra.mxu0 0.0
    %541 = vmatprep.subr.mxu0 0.0
    %542 = vmatpush2.msra.mxu0 0.0
    %543 = vmatprep.subr.mxu0 0.0
    %544 = vmatpush2.msra.mxu0 0.0
    %545 = vmatprep.subr.mxu0 0.0
    %546 = vmatpush2.msra.mxu0 0.0
    %547 = vmatprep.subr.mxu0 0.0
    %548 = vmatpush2.msra.mxu0 0.0
    %549 = vmatprep.subr.mxu0 0.0
    %550 = vmatpush2.msra.mxu0 0.0
    %551 = vmatprep.subr.mxu0 0.0
    %552 = vmatpush2.msra.mxu0 0.0
    %553 = vmatprep.subr.mxu0 0.0
    %554 = vmatpush2.msra.mxu0 0.0
    %555 = vmatprep.subr.mxu0 0.0
    %556 = vmatpush2.msra.mxu0 0.0
    %557 = vmatprep.subr.mxu0 0.0
    %558 = vmatpush2.msra.mxu0 0.0
    %559 = vmatprep.subr.mxu0 0.0
    %560 = vmatpush2.msra.mxu0 0.0
    %561 = vmatprep.subr.mxu0 0.0
    %562 = vmatpush2.msra.mxu0 0.0
    %563 = vmatprep.subr.mxu0 0.0
    %564 = vmatpush2.msra.mxu0 0.0
    %565 = vmatprep.subr.mxu0 0.0
    %566 = vmatpush2.msra.mxu0 0.0
    %567 = vmatprep.subr.mxu0 0.0
    %568 = vmatpush2.msra.mxu0 0.0
    %569 = vmatprep.mubr.f32.mxu0 0.0
    %570 = vmatmul.mubr.f32.gmra.mxu0 %v482
    %v571 = vpop.f32.mrf.mxu0
    %v572 = vadd.f32 0.0, %v571
    %v573 = vpop.f32.mrf.mxu0
    %v574 = vadd.f32 0.0, %v573
    %575 = vmatprep.mubr.f32.mxu0 0.0
    %576 = vmatmul.mubr.f32.gmra.mxu0 %v485
    %v577 = vpop.f32.mrf.mxu0
    %v578 = vadd.f32 0.0, %v577
    %v579 = vpop.f32.mrf.mxu0
    %v580 = vadd.f32 0.0, %v579
    %581 = vmatprep.mubr.f32.mxu0 0.0
    %582 = vmatmul.mubr.f32.gmra.mxu0 %v488
    %v583 = vpop.f32.mrf.mxu0
    %v584 = vadd.f32 0.0, %v583
    %v585 = vpop.f32.mrf.mxu0
    %v586 = vadd.f32 0.0, %v585
    %587 = vmatprep.mubr.f32.mxu0 0.0
    %588 = vmatmul.mubr.f32.gmra.mxu0 %v491
    %v589 = vpop.f32.mrf.mxu0
    %v590 = vadd.f32 0.0, %v589
    %v591 = vpop.f32.mrf.mxu0
    %v592 = vadd.f32 0.0, %v591
    %593 = vmatprep.mubr.f32.mxu0 0.0
    %594 = vmatmul.mubr.f32.gmra.mxu0 %v494
    %v595 = vpop.f32.mrf.mxu0
    %v596 = vadd.f32 0.0, %v595
    %v597 = vpop.f32.mrf.mxu0
    %v598 = vadd.f32 0.0, %v597
    %599 = vmatprep.mubr.f32.mxu0 0.0
    %600 = vmatmul.mubr.f32.gmra.mxu0 %v497
    %v601 = vpop.f32.mrf.mxu0
    %v602 = vadd.f32 0.0, %v601
    %v603 = vpop.f32.mrf.mxu0
    %v604 = vadd.f32 0.0, %v603
    %605 = vmatprep.mubr.f32.mxu0 0.0
    %606 = vmatmul.mubr.f32.gmra.mxu0 %v500
    %v607 = vpop.f32.mrf.mxu0
    %v608 = vadd.f32 0.0, %v607
    %v609 = vpop.f32.mrf.mxu0
    %v610 = vadd.f32 0.0, %v609
    %611 = vmatprep.mubr.f32.mxu0 0.0
    %612 = vmatmul.mubr.f32.gmra.mxu0 %v503
    %v613 = vpop.f32.mrf.mxu0
    %v614 = vadd.f32 0.0, %v613
    %v615 = vpop.f32.mrf.mxu0
    %v616 = vadd.f32 0.0, %v615
    %617 = vdwg.mxu0
    %v618 = vmax.f32 %v572, %v584
    %v619 = vmax.f32 %v578, %v590
    %v620 = vmax.f32 %v618, %v596
    %v621 = vmax.f32 %v619, %v602
    %v622 = vmax.f32 %v620, %v608
    %v623 = vmax.f32 %v621, %v614
    %v624 = vmax.f32 %v622, %v623
    %v625 = vrot.slane %v624, 4
    %v626 = vmax.f32 %v624, %v625
    %v627 = vrot.slane %v626, 2
    %v628 = vmax.f32 %v626, %v627
    %v629 = vrot.slane %v628, 1
    %v630 = vmax.f32 %v628, %v629
    %v631 = vmax.f32 %v574, %v586
    %v632 = vmax.f32 %v580, %v592
    %v633 = vmax.f32 %v631, %v598
    %v634 = vmax.f32 %v632, %v604
    %v635 = vmax.f32 %v633, %v610
    %v636 = vmax.f32 %v634, %v616
    %v637 = vmax.f32 %v635, %v636
    %v638 = vrot.slane %v637, 4
    %v639 = vmax.f32 %v637, %v638
    %v640 = vrot.slane %v639, 2
    %v641 = vmax.f32 %v639, %v640
    %v642 = vrot.slane %v641, 1
    %v643 = vmax.f32 %v641, %v642
    %v644 = vsub.f32 %v572, %v630
    %v645 = vsub.f32 %v574, %v643
    %v646 = vsub.f32 %v578, %v630
    %v647 = vsub.f32 %v580, %v643
    %v648 = vsub.f32 %v584, %v630
    %v649 = vsub.f32 %v586, %v643
    %v650 = vsub.f32 %v590, %v630
    %v651 = vsub.f32 %v592, %v643
    %v652 = vsub.f32 %v596, %v630
    %v653 = vsub.f32 %v598, %v643
    %v654 = vsub.f32 %v602, %v630
    %v655 = vsub.f32 %v604, %v643
    %v656 = vsub.f32 %v608, %v630
    %v657 = vsub.f32 %v610, %v643
    %v658 = vsub.f32 %v614, %v630
    %v659 = vsub.f32 %v616, %v643
    %v660 = vmul.f32 %v644, 1.442695
    %v661 = vpow.pop %v660
    %v662 = vmul.f32 %v645, 1.442695
    %v663 = vpow.pop %v662
    %v664 = vmul.f32 %v646, 1.442695
    %v665 = vpow.pop %v664
    %v666 = vmul.f32 %v647, 1.442695
    %v667 = vpow.pop %v666
    %v668 = vmul.f32 %v648, 1.442695
    %v669 = vpow.pop %v668
    %v670 = vmul.f32 %v649, 1.442695
    %v671 = vpow.pop %v670
    %v672 = vmul.f32 %v650, 1.442695
    %v673 = vpow.pop %v672
    %v674 = vmul.f32 %v651, 1.442695
    %v675 = vpow.pop %v674
    %v676 = vmul.f32 %v652, 1.442695
    %v677 = vpow.pop %v676
    %v678 = vmul.f32 %v653, 1.442695
    %v679 = vpow.pop %v678
    %v680 = vmul.f32 %v654, 1.442695
    %v681 = vpow.pop %v680
    %v682 = vmul.f32 %v655, 1.442695
    %v683 = vpow.pop %v682
    %v684 = vmul.f32 %v656, 1.442695
    %v685 = vpow.pop %v684
    %v686 = vmul.f32 %v657, 1.442695
    %v687 = vpow.pop %v686
    %v688 = vmul.f32 %v658, 1.442695
    %v689 = vpow.pop %v688
    %v690 = vmul.f32 %v659, 1.442695
    %v691 = vpow.pop %v690
    %v692 = vadd.f32 %v661, %v665
    %v693 = vadd.f32 %v692, %v669
    %v694 = vadd.f32 %v693, %v673
    %v695 = vadd.f32 %v694, %v677
    %v696 = vadd.f32 %v695, %v681
    %v697 = vadd.f32 %v696, %v685
    %v698 = vadd.f32 %v697, %v689
    %v699 = vrot.slane %v698, 4
    %v700 = vadd.f32 %v698, %v699
    %v701 = vrot.slane %v700, 2
    %v702 = vadd.f32 %v700, %v701
    %v703 = vrot.slane %v702, 1
    %v704 = vadd.f32 %v702, %v703
    %v705 = vadd.f32 %v663, %v667
    %v706 = vadd.f32 %v705, %v671
    %v707 = vadd.f32 %v706, %v675
    %v708 = vadd.f32 %v707, %v679
    %v709 = vadd.f32 %v708, %v683
    %v710 = vadd.f32 %v709, %v687
    %v711 = vadd.f32 %v710, %v691
    %v712 = vrot.slane %v711, 4
    %v713 = vadd.f32 %v711, %v712
    %v714 = vrot.slane %v713, 2
    %v715 = vadd.f32 %v713, %v714
    %v716 = vrot.slane %v715, 1
    %v717 = vadd.f32 %v715, %v716
    %v718 = vrcp.pop %v704
    %v719 = vrcp.pop %v717
    %v720 = vmul.f32 %v661, %v718
    %v721 = vmul.f32 %v663, %v719
    %v722 = vmul.f32 %v665, %v718
    %v723 = vmul.f32 %v667, %v719
    %v724 = vmul.f32 %v669, %v718
    %v725 = vmul.f32 %v671, %v719
    %v726 = vmul.f32 %v673, %v718
    %v727 = vmul.f32 %v675, %v719
    %v728 = vmul.f32 %v677, %v718
    %v729 = vmul.f32 %v679, %v719
    %v730 = vmul.f32 %v681, %v718
    %v731 = vmul.f32 %v683, %v719
    %v732 = vmul.f32 %v685, %v718
    %v733 = vmul.f32 %v687, %v719
    %v734 = vmul.f32 %v689, %v718
    %v735 = vmul.f32 %v691, %v719
    %vm736 = vcmask 523264
    %v738 = vsel %vm736, %v445, 0
    %v741 = vsel %vm736, %v446, 0
    %v744 = vsel %vm736, %v447, 0
    %v747 = vsel %vm736, %v448, 0
    %749 = vmatprep.subr.mxu0 0.0
    %750 = vmatpush1.msra.mxu0 0.0
    %751 = vmatprep.subr.mxu0 0.0
    %752 = vmatpush1.msra.mxu0 0.0
    %753 = vmatprep.subr.mxu0 0.0
    %754 = vmatpush1.msra.mxu0 0.0
    %755 = vmatprep.subr.mxu0 0.0
    %756 = vmatpush1.msra.mxu0 0.0
    %757 = vmatprep.subr.mxu0 0.0
    %758 = vmatpush1.msra.mxu0 0.0
    %759 = vmatprep.subr.mxu0 0.0
    %760 = vmatpush1.msra.mxu0 0.0
    %761 = vmatprep.subr.mxu0 0.0
    %762 = vmatpush1.msra.mxu0 0.0
    %763 = vmatprep.subr.mxu0 0.0
    %764 = vmatpush1.msra.mxu0 0.0
    %765 = vmatprep.subr.mxu0 %v735
    %766 = vmatpush1.msra.mxu0 %v734
    %767 = vmatprep.subr.mxu0 %v733
    %768 = vmatpush1.msra.mxu0 %v732
    %769 = vmatprep.subr.mxu0 %v731
    %770 = vmatpush1.msra.mxu0 %v730
    %771 = vmatprep.subr.mxu0 %v729
    %772 = vmatpush1.msra.mxu0 %v728
    %773 = vmatprep.subr.mxu0 %v727
    %774 = vmatpush1.msra.mxu0 %v726
    %775 = vmatprep.subr.mxu0 %v725
    %776 = vmatpush1.msra.mxu0 %v724
    %777 = vmatprep.subr.mxu0 %v723
    %778 = vmatpush1.msra.mxu0 %v722
    %779 = vmatprep.subr.mxu0 %v721
    %780 = vmatpush1.msra.mxu0 %v720
    %781 = vmatprep.subr.mxu0 0.0
    %782 = vmatpush2.msra.mxu0 0.0
    %783 = vmatprep.subr.mxu0 0.0
    %784 = vmatpush2.msra.mxu0 0.0
    %785 = vmatprep.subr.mxu0 0.0
    %786 = vmatpush2.msra.mxu0 0.0
    %787 = vmatprep.subr.mxu0 0.0
    %788 = vmatpush2.msra.mxu0 0.0
    %789 = vmatprep.subr.mxu0 0.0
    %790 = vmatpush2.msra.mxu0 0.0
    %791 = vmatprep.subr.mxu0 0.0
    %792 = vmatpush2.msra.mxu0 0.0
    %793 = vmatprep.subr.mxu0 0.0
    %794 = vmatpush2.msra.mxu0 0.0
    %795 = vmatprep.subr.mxu0 0.0
    %796 = vmatpush2.msra.mxu0 0.0
    %797 = vmatprep.subr.mxu0 0.0
    %798 = vmatpush2.msra.mxu0 0.0
    %799 = vmatprep.subr.mxu0 0.0
    %800 = vmatpush2.msra.mxu0 0.0
    %801 = vmatprep.subr.mxu0 0.0
    %802 = vmatpush2.msra.mxu0 0.0
    %803 = vmatprep.subr.mxu0 0.0
    %804 = vmatpush2.msra.mxu0 0.0
    %805 = vmatprep.subr.mxu0 0.0
    %806 = vmatpush2.msra.mxu0 0.0
    %807 = vmatprep.subr.mxu0 0.0
    %808 = vmatpush2.msra.mxu0 0.0
    %809 = vmatprep.subr.mxu0 0.0
    %810 = vmatpush2.msra.mxu0 0.0
    %811 = vmatprep.subr.mxu0 0.0
    %812 = vmatpush2.msra.mxu0 0.0
    %813 = vmatprep.mubr.f32.mxu0 0.0
    %814 = vmatmul.mubr.f32.gmra.mxu0 %v738
    %v815 = vpop.f32.mrf.mxu0
    %v816 = vadd.f32 0.0, %v815
    %v817 = vpop.f32.mrf.mxu0
    %v818 = vadd.f32 0.0, %v817
    %819 = vmatprep.mubr.f32.mxu0 0.0
    %820 = vmatmul.mubr.f32.gmra.mxu0 %v741
    %v821 = vpop.f32.mrf.mxu0
    %v822 = vadd.f32 0.0, %v821
    %v823 = vpop.f32.mrf.mxu0
    %v824 = vadd.f32 0.0, %v823
    %825 = vmatprep.mubr.f32.mxu0 0.0
    %826 = vmatmul.mubr.f32.gmra.mxu0 %v744
    %v827 = vpop.f32.mrf.mxu0
    %v828 = vadd.f32 0.0, %v827
    %v829 = vpop.f32.mrf.mxu0
    %v830 = vadd.f32 0.0, %v829
    %831 = vmatprep.mubr.f32.mxu0 0.0
    %832 = vmatmul.mubr.f32.gmra.mxu0 %v747
    %v833 = vpop.f32.mrf.mxu0
    %v834 = vadd.f32 0.0, %v833
    %v835 = vpop.f32.mrf.mxu0
    %v836 = vadd.f32 0.0, %v835
    %837 = vdwg.mxu0
    %839 = vset.pattern.permute.xlu0 0
    %840 = vperm.xlu0 %839, %v70
    %v841 = vpop.permute.xlu0 %840
    %844 = vset.pattern.permute.xlu0 0
    %845 = vperm.xlu0 %844, %v71
    %v846 = vpop.permute.xlu0 %845
    %849 = vset.pattern.permute.xlu0 0
    %850 = vperm.xlu0 %849, %v72
    %v851 = vpop.permute.xlu0 %850
    %854 = vset.pattern.permute.xlu0 0
    %855 = vperm.xlu0 %854, %v73
    %v856 = vpop.permute.xlu0 %855
    %859 = vset.pattern.permute.xlu0 0
    %860 = vperm.xlu0 %859, %v74
    %v861 = vpop.permute.xlu0 %860
    %864 = vset.pattern.permute.xlu0 0
    %865 = vperm.xlu0 %864, %v75
    %v866 = vpop.permute.xlu0 %865
    %869 = vset.pattern.permute.xlu0 0
    %870 = vperm.xlu0 %869, %v76
    %v871 = vpop.permute.xlu0 %870
    %874 = vset.pattern.permute.xlu0 0
    %875 = vperm.xlu0 %874, %v77
    %v876 = vpop.permute.xlu0 %875
    %v879 = vsel %vm736, %v62, 0
    %v882 = vsel %vm736, %v63, 0
    %v885 = vsel %vm736, %v64, 0
    %v888 = vsel %vm736, %v65, 0
    %v891 = vsel %vm736, %v66, 0
    %v894 = vsel %vm736, %v67, 0
    %v897 = vsel %vm736, %v68, 0
    %v900 = vsel %vm736, %v69, 0
    %902 = vmatprep.subr.mxu0 0.0
    %903 = vmatpush1.msra.mxu0 0.0
    %904 = vmatprep.subr.mxu0 0.0
    %905 = vmatpush1.msra.mxu0 0.0
    %906 = vmatprep.subr.mxu0 0.0
    %907 = vmatpush1.msra.mxu0 0.0
    %908 = vmatprep.subr.mxu0 0.0
    %909 = vmatpush1.msra.mxu0 0.0
    %910 = vmatprep.subr.mxu0 0.0
    %911 = vmatpush1.msra.mxu0 0.0
    %912 = vmatprep.subr.mxu0 0.0
    %913 = vmatpush1.msra.mxu0 0.0
    %914 = vmatprep.subr.mxu0 0.0
    %915 = vmatpush1.msra.mxu0 0.0
    %916 = vmatprep.subr.mxu0 0.0
    %917 = vmatpush1.msra.mxu0 0.0
    %918 = vmatprep.subr.mxu0 %v444
    %919 = vmatpush1.msra.mxu0 %v443
    %920 = vmatprep.subr.mxu0 %v442
    %921 = vmatpush1.msra.mxu0 %v441
    %922 = vmatprep.subr.mxu0 %v440
    %923 = vmatpush1.msra.mxu0 %v439
    %924 = vmatprep.subr.mxu0 %v438
    %925 = vmatpush1.msra.mxu0 %v437
    %926 = vmatprep.subr.mxu0 %v836
    %927 = vmatpush1.msra.mxu0 %v834
    %928 = vmatprep.subr.mxu0 %v830
    %929 = vmatpush1.msra.mxu0 %v828
    %930 = vmatprep.subr.mxu0 %v824
    %931 = vmatpush1.msra.mxu0 %v822
    %932 = vmatprep.subr.mxu0 %v818
    %933 = vmatpush1.msra.mxu0 %v816
    %934 = vmatprep.subr.mxu0 0.0
    %935 = vmatpush2.msra.mxu0 0.0
    %936 = vmatprep.subr.mxu0 0.0
    %937 = vmatpush2.msra.mxu0 0.0
    %938 = vmatprep.subr.mxu0 0.0
    %939 = vmatpush2.msra.mxu0 0.0
    %940 = vmatprep.subr.mxu0 0.0
    %941 = vmatpush2.msra.mxu0 0.0
    %942 = vmatprep.subr.mxu0 0.0
    %943 = vmatpush2.msra.mxu0 0.0
    %944 = vmatprep.subr.mxu0 0.0
    %945 = vmatpush2.msra.mxu0 0.0
    %946 = vmatprep.subr.mxu0 0.0
    %947 = vmatpush2.msra.mxu0 0.0
    %948 = vmatprep.subr.mxu0 0.0
    %949 = vmatpush2.msra.mxu0 0.0
    %950 = vmatprep.subr.mxu0 0.0
    %951 = vmatpush2.msra.mxu0 0.0
    %952 = vmatprep.subr.mxu0 0.0
    %953 = vmatpush2.msra.mxu0 0.0
    %954 = vmatprep.subr.mxu0 0.0
    %955 = vmatpush2.msra.mxu0 0.0
    %956 = vmatprep.subr.mxu0 0.0
    %957 = vmatpush2.msra.mxu0 0.0
    %958 = vmatprep.subr.mxu0 0.0
    %959 = vmatpush2.msra.mxu0 0.0
    %960 = vmatprep.subr.mxu0 0.0
    %961 = vmatpush2.msra.mxu0 0.0
    %962 = vmatprep.subr.mxu0 0.0
    %963 = vmatpush2.msra.mxu0 0.0
    %964 = vmatprep.subr.mxu0 0.0
    %965 = vmatpush2.msra.mxu0 0.0
    %966 = vmatprep.mubr.f32.mxu0 0.0
    %967 = vmatmul.mubr.f32.gmra.mxu0 %v879
    %v968 = vpop.f32.mrf.mxu0
    %v969 = vadd.f32 %v841, %v968
    %v970 = vpop.f32.mrf.mxu0
    %v971 = vadd.f32 %v841, %v970
    %972 = vmatprep.mubr.f32.mxu0 0.0
    %973 = vmatmul.mubr.f32.gmra.mxu0 %v882
    %v974 = vpop.f32.mrf.mxu0
    %v975 = vadd.f32 %v846, %v974
    %v976 = vpop.f32.mrf.mxu0
    %v977 = vadd.f32 %v846, %v976
    %978 = vmatprep.mubr.f32.mxu0 0.0
    %979 = vmatmul.mubr.f32.gmra.mxu0 %v885
    %v980 = vpop.f32.mrf.mxu0
    %v981 = vadd.f32 %v851, %v980
    %v982 = vpop.f32.mrf.mxu0
    %v983 = vadd.f32 %v851, %v982
    %984 = vmatprep.mubr.f32.mxu0 0.0
    %985 = vmatmul.mubr.f32.gmra.mxu0 %v888
    %v986 = vpop.f32.mrf.mxu0
    %v987 = vadd.f32 %v856, %v986
    %v988 = vpop.f32.mrf.mxu0
    %v989 = vadd.f32 %v856, %v988
    %990 = vmatprep.mubr.f32.mxu0 0.0
    %991 = vmatmul.mubr.f32.gmra.mxu0 %v891
    %v992 = vpop.f32.mrf.mxu0
    %v993 = vadd.f32 %v861, %v992
    %v994 = vpop.f32.mrf.mxu0
    %v995 = vadd.f32 %v861, %v994
    %996 = vmatprep.mubr.f32.mxu0 0.0
    %997 = vmatmul.mubr.f32.gmra.mxu0 %v894
    %v998 = vpop.f32.mrf.mxu0
    %v999 = vadd.f32 %v866, %v998
    %v1000 = vpop.f32.mrf.mxu0
    %v1001 = vadd.f32 %v866, %v1000
    %1002 = vmatprep.mubr.f32.mxu0 0.0
    %1003 = vmatmul.mubr.f32.gmra.mxu0 %v897
    %v1004 = vpop.f32.mrf.mxu0
    %v1005 = vadd.f32 %v871, %v1004
    %v1006 = vpop.f32.mrf.mxu0
    %v1007 = vadd.f32 %v871, %v1006
    %1008 = vmatprep.mubr.f32.mxu0 0.0
    %1009 = vmatmul.mubr.f32.gmra.mxu0 %v900
    %v1010 = vpop.f32.mrf.mxu0
    %v1011 = vadd.f32 %v876, %v1010
    %v1012 = vpop.f32.mrf.mxu0
    %v1013 = vadd.f32 %v876, %v1012
    %1014 = vdwg.mxu0
    %v1015 = vmax.f32 %v969, 0.0
    %v1016 = vmax.f32 %v971, 0.0
    %v1017 = vmax.f32 %v975, 0.0
    %v1018 = vmax.f32 %v977, 0.0
    %v1019 = vmax.f32 %v981, 0.0
    %v1020 = vmax.f32 %v983, 0.0
    %v1021 = vmax.f32 %v987, 0.0
    %v1022 = vmax.f32 %v989, 0.0
    %v1023 = vmax.f32 %v993, 0.0
    %v1024 = vmax.f32 %v995, 0.0
    %v1025 = vmax.f32 %v999, 0.0
    %v1026 = vmax.f32 %v1001, 0.0
    %v1027 = vmax.f32 %v1005, 0.0
    %v1028 = vmax.f32 %v1007, 0.0
    %v1029 = vmax.f32 %v1011, 0.0
    %v1030 = vmax.f32 %v1013, 0.0
    %1031 = vst [vmem:[#allocation2] sm:$0xff] %v1015
    %1032 = vst [vmem:[#allocation2 + $0x8] sm:$0xff] %v1016
    %1033 = vst [vmem:[#allocation2 + $0x10] sm:$0xff] %v1017
    %1034 = vst [vmem:[#allocation2 + $0x18] sm:$0xff] %v1018
    %1035 = vst [vmem:[#allocation2 + $0x20] sm:$0xff] %v1019
    %1036 = vst [vmem:[#allocation2 + $0x28] sm:$0xff] %v1020
    %1037 = vst [vmem:[#allocation2 + $0x30] sm:$0xff] %v1021
    %1038 = vst [vmem:[#allocation2 + $0x38] sm:$0xff] %v1022
    %1039 = vst [vmem:[#allocation2 + $0x40] sm:$0xff] %v1023
    %1040 = vst [vmem:[#allocation2 + $0x48] sm:$0xff] %v1024
    %1041 = vst [vmem:[#allocation2 + $0x50] sm:$0xff] %v1025
    %1042 = vst [vmem:[#allocation2 + $0x58] sm:$0xff] %v1026
    %1043 = vst [vmem:[#allocation2 + $0x60] sm:$0xff] %v1027
    %1044 = vst [vmem:[#allocation2 + $0x68] sm:$0xff] %v1028
    %1045 = vst [vmem:[#allocation2 + $0x70] sm:$0xff] %v1029
    %1046 = vst [vmem:[#allocation2 + $0x78] sm:$0xff] %v1030
    %s1047 = scalar_lea.vmem %s0, 32
    %v1048 = vld [vmem:[%s1047] sm:$0xff]
    %v1049 = vld [vmem:[%s1047 + $0x8] sm:$0xff]
    %v1050 = vld [vmem:[%s1047 + $0x10] sm:$0xff]
    %v1051 = vld [vmem:[%s1047 + $0x18] sm:$0xff]
    %s1052 = scalar_lea.vmem %s1, 64
    %v1053 = vld [vmem:[%s1052] sm:$0xff]
    %v1054 = vld [vmem:[%s1052 + $0x8] sm:$0xff]
    %v1055 = vld [vmem:[%s1052 + $0x10] sm:$0xff]
    %v1056 = vld [vmem:[%s1052 + $0x18] sm:$0xff]
    %v1057 = vld [vmem:[%s1052 + $0x20] sm:$0xff]
    %v1058 = vld [vmem:[%s1052 + $0x28] sm:$0xff]
    %v1059 = vld [vmem:[%s1052 + $0x30] sm:$0xff]
    %v1060 = vld [vmem:[%s1052 + $0x38] sm:$0xff]
    %1061 = vmatprep.subr.mxu0 0.0
    %1062 = vmatpush1.msra.mxu0 0.0
    %1063 = vmatprep.subr.mxu0 0.0
    %1064 = vmatpush1.msra.mxu0 0.0
    %1065 = vmatprep.subr.mxu0 0.0
    %1066 = vmatpush1.msra.mxu0 0.0
    %1067 = vmatprep.subr.mxu0 0.0
    %1068 = vmatpush1.msra.mxu0 0.0
    %1069 = vmatprep.subr.mxu0 0.0
    %1070 = vmatpush1.msra.mxu0 0.0
    %1071 = vmatprep.subr.mxu0 0.0
    %1072 = vmatpush1.msra.mxu0 0.0
    %1073 = vmatprep.subr.mxu0 0.0
    %1074 = vmatpush1.msra.mxu0 0.0
    %1075 = vmatprep.subr.mxu0 0.0
    %1076 = vmatpush1.msra.mxu0 0.0
    %1077 = vmatprep.subr.mxu0 0.0
    %1078 = vmatpush1.msra.mxu0 0.0
    %1079 = vmatprep.subr.mxu0 0.0
    %1080 = vmatpush1.msra.mxu0 0.0
    %1081 = vmatprep.subr.mxu0 0.0
    %1082 = vmatpush1.msra.mxu0 0.0
    %1083 = vmatprep.subr.mxu0 0.0
    %1084 = vmatpush1.msra.mxu0 0.0
    %1085 = vmatprep.subr.mxu0 %v1060
    %1086 = vmatpush1.msra.mxu0 %v1059
    %1087 = vmatprep.subr.mxu0 %v1058
    %1088 = vmatpush1.msra.mxu0 %v1057
    %1089 = vmatprep.subr.mxu0 %v1056
    %1090 = vmatpush1.msra.mxu0 %v1055
    %1091 = vmatprep.subr.mxu0 %v1054
    %1092 = vmatpush1.msra.mxu0 %v1053
    %1093 = vmatprep.subr.mxu0 0.0
    %1094 = vmatpush2.msra.mxu0 0.0
    %1095 = vmatprep.subr.mxu0 0.0
    %1096 = vmatpush2.msra.mxu0 0.0
    %1097 = vmatprep.subr.mxu0 0.0
    %1098 = vmatpush2.msra.mxu0 0.0
    %1099 = vmatprep.subr.mxu0 0.0
    %1100 = vmatpush2.msra.mxu0 0.0
    %1101 = vmatprep.subr.mxu0 0.0
    %1102 = vmatpush2.msra.mxu0 0.0
    %1103 = vmatprep.subr.mxu0 0.0
    %1104 = vmatpush2.msra.mxu0 0.0
    %1105 = vmatprep.subr.mxu0 0.0
    %1106 = vmatpush2.msra.mxu0 0.0
    %1107 = vmatprep.subr.mxu0 0.0
    %1108 = vmatpush2.msra.mxu0 0.0
    %1109 = vmatprep.subr.mxu0 0.0
    %1110 = vmatpush2.msra.mxu0 0.0
    %1111 = vmatprep.subr.mxu0 0.0
    %1112 = vmatpush2.msra.mxu0 0.0
    %1113 = vmatprep.subr.mxu0 0.0
    %1114 = vmatpush2.msra.mxu0 0.0
    %1115 = vmatprep.subr.mxu0 0.0
    %1116 = vmatpush2.msra.mxu0 0.0
    %1117 = vmatprep.subr.mxu0 0.0
    %1118 = vmatpush2.msra.mxu0 0.0
    %1119 = vmatprep.subr.mxu0 0.0
    %1120 = vmatpush2.msra.mxu0 0.0
    %1121 = vmatprep.subr.mxu0 0.0
    %1122 = vmatpush2.msra.mxu0 0.0
    %1123 = vmatprep.subr.mxu0 0.0
    %1124 = vmatpush2.msra.mxu0 0.0
    %1125 = vmatprep.mubr.f32.mxu0 0.0
    %1126 = vmatmul.mubr.f32.gmra.mxu0 %v132
    %v1127 = vpop.f32.mrf.mxu0
    %v1128 = vadd.f32 %v93, %v1127
    %v1129 = vpop.f32.mrf.mxu0
    %v1130 = vadd.f32 %v93, %v1129
    %1131 = vmatprep.mubr.f32.mxu0 0.0
    %1132 = vmatmul.mubr.f32.gmra.mxu0 %v135
    %v1133 = vpop.f32.mrf.mxu0
    %v1134 = vadd.f32 %v98, %v1133
    %v1135 = vpop.f32.mrf.mxu0
    %v1136 = vadd.f32 %v98, %v1135
    %1137 = vmatprep.mubr.f32.mxu0 0.0
    %1138 = vmatmul.mubr.f32.gmra.mxu0 %v138
    %v1139 = vpop.f32.mrf.mxu0
    %v1140 = vadd.f32 %v103, %v1139
    %v1141 = vpop.f32.mrf.mxu0
    %v1142 = vadd.f32 %v103, %v1141
    %1143 = vmatprep.mubr.f32.mxu0 0.0
    %1144 = vmatmul.mubr.f32.gmra.mxu0 %v141
    %v1145 = vpop.f32.mrf.mxu0
    %v1146 = vadd.f32 %v108, %v1145
    %v1147 = vpop.f32.mrf.mxu0
    %v1148 = vadd.f32 %v108, %v1147
    %1149 = vmatprep.mubr.f32.mxu0 0.0
    %1150 = vmatmul.mubr.f32.gmra.mxu0 %v144
    %v1151 = vpop.f32.mrf.mxu0
    %v1152 = vadd.f32 %v113, %v1151
    %v1153 = vpop.f32.mrf.mxu0
    %v1154 = vadd.f32 %v113, %v1153
    %1155 = vmatprep.mubr.f32.mxu0 0.0
    %1156 = vmatmul.mubr.f32.gmra.mxu0 %v147
    %v1157 = vpop.f32.mrf.mxu0
    %v1158 = vadd.f32 %v118, %v1157
    %v1159 = vpop.f32.mrf.mxu0
    %v1160 = vadd.f32 %v118, %v1159
    %1161 = vmatprep.mubr.f32.mxu0 0.0
    %1162 = vmatmul.mubr.f32.gmra.mxu0 %v150
    %v1163 = vpop.f32.mrf.mxu0
    %v1164 = vadd.f32 %v123, %v1163
    %v1165 = vpop.f32.mrf.mxu0
    %v1166 = vadd.f32 %v123, %v1165
    %1167 = vmatprep.mubr.f32.mxu0 0.0
    %1168 = vmatmul.mubr.f32.gmra.mxu0 %v153
    %v1169 = vpop.f32.mrf.mxu0
    %v1170 = vadd.f32 %v128, %v1169
    %v1171 = vpop.f32.mrf.mxu0
    %v1172 = vadd.f32 %v128, %v1171
    %1173 = vdwg.mxu0
    %1174 = vmatprep.subr.mxu0 0.0
    %1175 = vmatpush1.msra.mxu0 0.0
    %1176 = vmatprep.subr.mxu0 0.0
    %1177 = vmatpush1.msra.mxu0 0.0
    %1178 = vmatprep.subr.mxu0 0.0
    %1179 = vmatpush1.msra.mxu0 0.0
    %1180 = vmatprep.subr.mxu0 0.0
    %1181 = vmatpush1.msra.mxu0 0.0
    %1182 = vmatprep.subr.mxu0 0.0
    %1183 = vmatpush1.msra.mxu0 0.0
    %1184 = vmatprep.subr.mxu0 0.0
    %1185 = vmatpush1.msra.mxu0 0.0
    %1186 = vmatprep.subr.mxu0 0.0
    %1187 = vmatpush1.msra.mxu0 0.0
    %1188 = vmatprep.subr.mxu0 0.0
    %1189 = vmatpush1.msra.mxu0 0.0
    %1190 = vmatprep.subr.mxu0 0.0
    %1191 = vmatpush1.msra.mxu0 0.0
    %1192 = vmatprep.subr.mxu0 0.0
    %1193 = vmatpush1.msra.mxu0 0.0
    %1194 = vmatprep.subr.mxu0 0.0
    %1195 = vmatpush1.msra.mxu0 0.0
    %1196 = vmatprep.subr.mxu0 0.0
    %1197 = vmatpush1.msra.mxu0 0.0
    %1198 = vmatprep.subr.mxu0 0.0
    %1199 = vmatpush1.msra.mxu0 %v1051
    %1200 = vmatprep.subr.mxu0 0.0
    %1201 = vmatpush1.msra.mxu0 %v1050
    %1202 = vmatprep.subr.mxu0 0.0
    %1203 = vmatpush1.msra.mxu0 %v1049
    %1204 = vmatprep.subr.mxu0 0.0
    %1205 = vmatpush1.msra.mxu0 %v1048
    %1206 = vmatprep.subr.mxu0 0.0
    %1207 = vmatpush2.msra.mxu0 0.0
    %1208 = vmatprep.subr.mxu0 0.0
    %1209 = vmatpush2.msra.mxu0 0.0
    %1210 = vmatprep.subr.mxu0 0.0
    %1211 = vmatpush2.msra.mxu0 0.0
    %1212 = vmatprep.subr.mxu0 0.0
    %1213 = vmatpush2.msra.mxu0 0.0
    %1214 = vmatprep.subr.mxu0 0.0
    %1215 = vmatpush2.msra.mxu0 0.0
    %1216 = vmatprep.subr.mxu0 0.0
    %1217 = vmatpush2.msra.mxu0 0.0
    %1218 = vmatprep.subr.mxu0 0.0
    %1219 = vmatpush2.msra.mxu0 0.0
    %1220 = vmatprep.subr.mxu0 0.0
    %1221 = vmatpush2.msra.mxu0 0.0
    %1222 = vmatprep.subr.mxu0 0.0
    %1223 = vmatpush2.msra.mxu0 0.0
    %1224 = vmatprep.subr.mxu0 0.0
    %1225 = vmatpush2.msra.mxu0 0.0
    %1226 = vmatprep.subr.mxu0 0.0
    %1227 = vmatpush2.msra.mxu0 0.0
    %1228 = vmatprep.subr.mxu0 0.0
    %1229 = vmatpush2.msra.mxu0 0.0
    %1230 = vmatprep.subr.mxu0 0.0
    %1231 = vmatpush2.msra.mxu0 0.0
    %1232 = vmatprep.subr.mxu0 0.0
    %1233 = vmatpush2.msra.mxu0 0.0
    %1234 = vmatprep.subr.mxu0 0.0
    %1235 = vmatpush2.msra.mxu0 0.0
    %1236 = vmatprep.subr.mxu0 0.0
    %1237 = vmatpush2.msra.mxu0 0.0
    %1238 = vmatprep.mubr.f32.mxu0 0.0
    %1239 = vmatmul.mubr.f32.gmra.mxu0 %v309
    %v1240 = vpop.f32.mrf.mxu0
    %v1241 = vadd.f32 %v271, %v1240
    %v1242 = vpop.f32.mrf.mxu0
    %1243 = vmatprep.mubr.f32.mxu0 0.0
    %1244 = vmatmul.mubr.f32.gmra.mxu0 %v312
    %v1245 = vpop.f32.mrf.mxu0
    %v1246 = vadd.f32 %v276, %v1245
    %v1247 = vpop.f32.mrf.mxu0
    %1248 = vmatprep.mubr.f32.mxu0 0.0
    %1249 = vmatmul.mubr.f32.gmra.mxu0 %v315
    %v1250 = vpop.f32.mrf.mxu0
    %v1251 = vadd.f32 %v281, %v1250
    %v1252 = vpop.f32.mrf.mxu0
    %1253 = vmatprep.mubr.f32.mxu0 0.0
    %1254 = vmatmul.mubr.f32.gmra.mxu0 %v318
    %v1255 = vpop.f32.mrf.mxu0
    %v1256 = vadd.f32 %v286, %v1255
    %v1257 = vpop.f32.mrf.mxu0
    %1258 = vmatprep.mubr.f32.mxu0 0.0
    %1259 = vmatmul.mubr.f32.gmra.mxu0 %v321
    %v1260 = vpop.f32.mrf.mxu0
    %v1261 = vadd.f32 %v291, %v1260
    %v1262 = vpop.f32.mrf.mxu0
    %1263 = vmatprep.mubr.f32.mxu0 0.0
    %1264 = vmatmul.mubr.f32.gmra.mxu0 %v324
    %v1265 = vpop.f32.mrf.mxu0
    %v1266 = vadd.f32 %v296, %v1265
    %v1267 = vpop.f32.mrf.mxu0
    %1268 = vmatprep.mubr.f32.mxu0 0.0
    %1269 = vmatmul.mubr.f32.gmra.mxu0 %v327
    %v1270 = vpop.f32.mrf.mxu0
    %v1271 = vadd.f32 %v301, %v1270
    %v1272 = vpop.f32.mrf.mxu0
    %1273 = vmatprep.mubr.f32.mxu0 0.0
    %1274 = vmatmul.mubr.f32.gmra.mxu0 %v330
    %v1275 = vpop.f32.mrf.mxu0
    %v1276 = vadd.f32 %v306, %v1275
    %v1277 = vpop.f32.mrf.mxu0
    %1278 = vdwg.mxu0
    %v1279 = vmax.f32 %v1152, 0.0
    %v1280 = vmax.f32 %v1154, 0.0
    %v1281 = vmax.f32 %v1158, 0.0
    %v1282 = vmax.f32 %v1160, 0.0
    %v1283 = vmax.f32 %v1164, 0.0
    %v1284 = vmax.f32 %v1166, 0.0
    %v1285 = vmax.f32 %v1170, 0.0
    %v1286 = vmax.f32 %v1172, 0.0
    %v1287 = vmax.f32 %v1261, 0.0
    %v1288 = vmax.f32 %v1266, 0.0
    %v1289 = vmax.f32 %v1271, 0.0
    %v1290 = vmax.f32 %v1276, 0.0
    %1291 = vxpose.xlu0.b32.start [1/16] %v1241, 128
    %1292 = vxpose.xlu0.b32.cont [2/16] %v1246, 128
    %1293 = vxpose.xlu0.b32.cont [3/16] %v1251, 128
    %1294 = vxpose.xlu0.b32.cont [4/16] %v1256, 128
    %1295 = vxpose.xlu0.b32.cont [5/16] 0.0, 128
    %1296 = vxpose.xlu0.b32.cont [6/16] 0.0, 128
    %1297 = vxpose.xlu0.b32.cont [7/16] 0.0, 128
    %1298 = vxpose.xlu0.b32.cont [8/16] 0.0, 128
    %1299 = vxpose.xlu0.b32.cont [9/16] 0.0, 128
    %1300 = vxpose.xlu0.b32.cont [10/16] 0.0, 128
    %1301 = vxpose.xlu0.b32.cont [11/16] 0.0, 128
    %1302 = vxpose.xlu0.b32.cont [12/16] 0.0, 128
    %1303 = vxpose.xlu0.b32.cont [13/16] 0.0, 128
    %1304 = vxpose.xlu0.b32.cont [14/16] 0.0, 128
    %1305 = vxpose.xlu0.b32.cont [15/16] 0.0, 128
    %1306 = vxpose.xlu0.b32.end [16/16] 0.0, 128
    %v1307 = vpop.trf.xlu0
    %v1308 = vpop.trf.xlu0
    %v1309 = vpop.trf.xlu0
    %v1310 = vpop.trf.xlu0
    %v1311 = vpop.trf.xlu0
    %v1312 = vpop.trf.xlu0
    %v1313 = vpop.trf.xlu0
    %v1314 = vpop.trf.xlu0
    %v1315 = vpop.trf.xlu0
    %v1316 = vpop.trf.xlu0
    %v1317 = vpop.trf.xlu0
    %v1318 = vpop.trf.xlu0
    %v1319 = vpop.trf.xlu0
    %v1320 = vpop.trf.xlu0
    %v1321 = vpop.trf.xlu0
    %v1322 = vpop.trf.xlu0
    %v1324 = vsel %vm130, %v1307, 0
    %v1327 = vsel %vm130, %v1308, 0
    %v1330 = vsel %vm130, %v1309, 0
    %v1333 = vsel %vm130, %v1310, 0
    %v1336 = vsel %vm130, %v1311, 0
    %v1339 = vsel %vm130, %v1312, 0
    %v1342 = vsel %vm130, %v1313, 0
    %v1345 = vsel %vm130, %v1314, 0
    %1347 = vmatprep.subr.mxu0 0.0
    %1348 = vmatpush1.msra.mxu0 0.0
    %1349 = vmatprep.subr.mxu0 0.0
    %1350 = vmatpush1.msra.mxu0 0.0
    %1351 = vmatprep.subr.mxu0 0.0
    %1352 = vmatpush1.msra.mxu0 0.0
    %1353 = vmatprep.subr.mxu0 0.0
    %1354 = vmatpush1.msra.mxu0 0.0
    %1355 = vmatprep.subr.mxu0 0.0
    %1356 = vmatpush1.msra.mxu0 0.0
    %1357 = vmatprep.subr.mxu0 0.0
    %1358 = vmatpush1.msra.mxu0 0.0
    %1359 = vmatprep.subr.mxu0 0.0
    %1360 = vmatpush1.msra.mxu0 0.0
    %1361 = vmatprep.subr.mxu0 0.0
    %1362 = vmatpush1.msra.mxu0 0.0
    %1363 = vmatprep.subr.mxu0 0.0
    %1364 = vmatpush1.msra.mxu0 0.0
    %1365 = vmatprep.subr.mxu0 0.0
    %1366 = vmatpush1.msra.mxu0 0.0
    %1367 = vmatprep.subr.mxu0 0.0
    %1368 = vmatpush1.msra.mxu0 0.0
    %1369 = vmatprep.subr.mxu0 0.0
    %1370 = vmatpush1.msra.mxu0 0.0
    %1371 = vmatprep.subr.mxu0 %v1148
    %1372 = vmatpush1.msra.mxu0 %v1146
    %1373 = vmatprep.subr.mxu0 %v1142
    %1374 = vmatpush1.msra.mxu0 %v1140
    %1375 = vmatprep.subr.mxu0 %v1136
    %1376 = vmatpush1.msra.mxu0 %v1134
    %1377 = vmatprep.subr.mxu0 %v1130
    %1378 = vmatpush1.msra.mxu0 %v1128
    %1379 = vmatprep.subr.mxu0 0.0
    %1380 = vmatpush2.msra.mxu0 0.0
    %1381 = vmatprep.subr.mxu0 0.0
    %1382 = vmatpush2.msra.mxu0 0.0
    %1383 = vmatprep.subr.mxu0 0.0
    %1384 = vmatpush2.msra.mxu0 0.0
    %1385 = vmatprep.subr.mxu0 0.0
    %1386 = vmatpush2.msra.mxu0 0.0
    %1387 = vmatprep.subr.mxu0 0.0
    %1388 = vmatpush2.msra.mxu0 0.0
    %1389 = vmatprep.subr.mxu0 0.0
    %1390 = vmatpush2.msra.mxu0 0.0
    %1391 = vmatprep.subr.mxu0 0.0
    %1392 = vmatpush2.msra.mxu0 0.0
    %1393 = vmatprep.subr.mxu0 0.0
    %1394 = vmatpush2.msra.mxu0 0.0
    %1395 = vmatprep.subr.mxu0 0.0
    %1396 = vmatpush2.msra.mxu0 0.0
    %1397 = vmatprep.subr.mxu0 0.0
    %1398 = vmatpush2.msra.mxu0 0.0
    %1399 = vmatprep.subr.mxu0 0.0
    %1400 = vmatpush2.msra.mxu0 0.0
    %1401 = vmatprep.subr.mxu0 0.0
    %1402 = vmatpush2.msra.mxu0 0.0
    %1403 = vmatprep.subr.mxu0 0.0
    %1404 = vmatpush2.msra.mxu0 0.0
    %1405 = vmatprep.subr.mxu0 0.0
    %1406 = vmatpush2.msra.mxu0 0.0
    %1407 = vmatprep.subr.mxu0 0.0
    %1408 = vmatpush2.msra.mxu0 0.0
    %1409 = vmatprep.subr.mxu0 0.0
    %1410 = vmatpush2.msra.mxu0 0.0
    %1411 = vmatprep.mubr.f32.mxu0 0.0
    %1412 = vmatmul.mubr.f32.gmra.mxu0 %v1324
    %v1413 = vpop.f32.mrf.mxu0
    %v1414 = vadd.f32 0.0, %v1413
    %v1415 = vpop.f32.mrf.mxu0
    %v1416 = vadd.f32 0.0, %v1415
    %1417 = vmatprep.mubr.f32.mxu0 0.0
    %1418 = vmatmul.mubr.f32.gmra.mxu0 %v1327
    %v1419 = vpop.f32.mrf.mxu0
    %v1420 = vadd.f32 0.0, %v1419
    %v1421 = vpop.f32.mrf.mxu0
    %v1422 = vadd.f32 0.0, %v1421
    %1423 = vmatprep.mubr.f32.mxu0 0.0
    %1424 = vmatmul.mubr.f32.gmra.mxu0 %v1330
    %v1425 = vpop.f32.mrf.mxu0
    %v1426 = vadd.f32 0.0, %v1425
    %v1427 = vpop.f32.mrf.mxu0
    %v1428 = vadd.f32 0.0, %v1427
    %1429 = vmatprep.mubr.f32.mxu0 0.0
    %1430 = vmatmul.mubr.f32.gmra.mxu0 %v1333
    %v1431 = vpop.f32.mrf.mxu0
    %v1432 = vadd.f32 0.0, %v1431
    %v1433 = vpop.f32.mrf.mxu0
    %v1434 = vadd.f32 0.0, %v1433
    %1435 = vmatprep.mubr.f32.mxu0 0.0
    %1436 = vmatmul.mubr.f32.gmra.mxu0 %v1336
    %v1437 = vpop.f32.mrf.mxu0
    %v1438 = vadd.f32 0.0, %v1437
    %v1439 = vpop.f32.mrf.mxu0
    %v1440 = vadd.f32 0.0, %v1439
    %1441 = vmatprep.mubr.f32.mxu0 0.0
    %1442 = vmatmul.mubr.f32.gmra.mxu0 %v1339
    %v1443 = vpop.f32.mrf.mxu0
    %v1444 = vadd.f32 0.0, %v1443
    %v1445 = vpop.f32.mrf.mxu0
    %v1446 = vadd.f32 0.0, %v1445
    %1447 = vmatprep.mubr.f32.mxu0 0.0
    %1448 = vmatmul.mubr.f32.gmra.mxu0 %v1342
    %v1449 = vpop.f32.mrf.mxu0
    %v1450 = vadd.f32 0.0, %v1449
    %v1451 = vpop.f32.mrf.mxu0
    %v1452 = vadd.f32 0.0, %v1451
    %1453 = vmatprep.mubr.f32.mxu0 0.0
    %1454 = vmatmul.mubr.f32.gmra.mxu0 %v1345
    %v1455 = vpop.f32.mrf.mxu0
    %v1456 = vadd.f32 0.0, %v1455
    %v1457 = vpop.f32.mrf.mxu0
    %v1458 = vadd.f32 0.0, %v1457
    %1459 = vdwg.mxu0
    %v1460 = vmax.f32 %v1414, %v1426
    %v1461 = vmax.f32 %v1420, %v1432
    %v1462 = vmax.f32 %v1460, %v1438
    %v1463 = vmax.f32 %v1461, %v1444
    %v1464 = vmax.f32 %v1462, %v1450
    %v1465 = vmax.f32 %v1463, %v1456
    %v1466 = vmax.f32 %v1464, %v1465
    %v1467 = vrot.slane %v1466, 4
    %v1468 = vmax.f32 %v1466, %v1467
    %v1469 = vrot.slane %v1468, 2
    %v1470 = vmax.f32 %v1468, %v1469
    %v1471 = vrot.slane %v1470, 1
    %v1472 = vmax.f32 %v1470, %v1471
    %v1473 = vmax.f32 %v1416, %v1428
    %v1474 = vmax.f32 %v1422, %v1434
    %v1475 = vmax.f32 %v1473, %v1440
    %v1476 = vmax.f32 %v1474, %v1446
    %v1477 = vmax.f32 %v1475, %v1452
    %v1478 = vmax.f32 %v1476, %v1458
    %v1479 = vmax.f32 %v1477, %v1478
    %v1480 = vrot.slane %v1479, 4
    %v1481 = vmax.f32 %v1479, %v1480
    %v1482 = vrot.slane %v1481, 2
    %v1483 = vmax.f32 %v1481, %v1482
    %v1484 = vrot.slane %v1483, 1
    %v1485 = vmax.f32 %v1483, %v1484
    %v1486 = vsub.f32 %v1414, %v1472
    %v1487 = vsub.f32 %v1416, %v1485
    %v1488 = vsub.f32 %v1420, %v1472
    %v1489 = vsub.f32 %v1422, %v1485
    %v1490 = vsub.f32 %v1426, %v1472
    %v1491 = vsub.f32 %v1428, %v1485
    %v1492 = vsub.f32 %v1432, %v1472
    %v1493 = vsub.f32 %v1434, %v1485
    %v1494 = vsub.f32 %v1438, %v1472
    %v1495 = vsub.f32 %v1440, %v1485
    %v1496 = vsub.f32 %v1444, %v1472
    %v1497 = vsub.f32 %v1446, %v1485
    %v1498 = vsub.f32 %v1450, %v1472
    %v1499 = vsub.f32 %v1452, %v1485
    %v1500 = vsub.f32 %v1456, %v1472
    %v1501 = vsub.f32 %v1458, %v1485
    %v1502 = vmul.f32 %v1486, 1.442695
    %v1503 = vpow.pop %v1502
    %v1504 = vmul.f32 %v1487, 1.442695
    %v1505 = vpow.pop %v1504
    %v1506 = vmul.f32 %v1488, 1.442695
    %v1507 = vpow.pop %v1506
    %v1508 = vmul.f32 %v1489, 1.442695
    %v1509 = vpow.pop %v1508
    %v1510 = vmul.f32 %v1490, 1.442695
    %v1511 = vpow.pop %v1510
    %v1512 = vmul.f32 %v1491, 1.442695
    %v1513 = vpow.pop %v1512
    %v1514 = vmul.f32 %v1492, 1.442695
    %v1515 = vpow.pop %v1514
    %v1516 = vmul.f32 %v1493, 1.442695
    %v1517 = vpow.pop %v1516
    %v1518 = vmul.f32 %v1494, 1.442695
    %v1519 = vpow.pop %v1518
    %v1520 = vmul.f32 %v1495, 1.442695
    %v1521 = vpow.pop %v1520
    %v1522 = vmul.f32 %v1496, 1.442695
    %v1523 = vpow.pop %v1522
    %v1524 = vmul.f32 %v1497, 1.442695
    %v1525 = vpow.pop %v1524
    %v1526 = vmul.f32 %v1498, 1.442695
    %v1527 = vpow.pop %v1526
    %v1528 = vmul.f32 %v1499, 1.442695
    %v1529 = vpow.pop %v1528
    %v1530 = vmul.f32 %v1500, 1.442695
    %v1531 = vpow.pop %v1530
    %v1532 = vmul.f32 %v1501, 1.442695
    %v1533 = vpow.pop %v1532
    %v1534 = vadd.f32 %v1503, %v1507
    %v1535 = vadd.f32 %v1534, %v1511
    %v1536 = vadd.f32 %v1535, %v1515
    %v1537 = vadd.f32 %v1536, %v1519
    %v1538 = vadd.f32 %v1537, %v1523
    %v1539 = vadd.f32 %v1538, %v1527
    %v1540 = vadd.f32 %v1539, %v1531
    %v1541 = vrot.slane %v1540, 4
    %v1542 = vadd.f32 %v1540, %v1541
    %v1543 = vrot.slane %v1542, 2
    %v1544 = vadd.f32 %v1542, %v1543
    %v1545 = vrot.slane %v1544, 1
    %v1546 = vadd.f32 %v1544, %v1545
    %v1547 = vadd.f32 %v1505, %v1509
    %v1548 = vadd.f32 %v1547, %v1513
    %v1549 = vadd.f32 %v1548, %v1517
    %v1550 = vadd.f32 %v1549, %v1521
    %v1551 = vadd.f32 %v1550, %v1525
    %v1552 = vadd.f32 %v1551, %v1529
    %v1553 = vadd.f32 %v1552, %v1533
    %v1554 = vrot.slane %v1553, 4
    %v1555 = vadd.f32 %v1553, %v1554
    %v1556 = vrot.slane %v1555, 2
    %v1557 = vadd.f32 %v1555, %v1556
    %v1558 = vrot.slane %v1557, 1
    %v1559 = vadd.f32 %v1557, %v1558
    %v1560 = vrcp.pop %v1546
    %v1561 = vrcp.pop %v1559
    %v1562 = vmul.f32 %v1503, %v1560
    %v1563 = vmul.f32 %v1505, %v1561
    %v1564 = vmul.f32 %v1507, %v1560
    %v1565 = vmul.f32 %v1509, %v1561
    %v1566 = vmul.f32 %v1511, %v1560
    %v1567 = vmul.f32 %v1513, %v1561
    %v1568 = vmul.f32 %v1515, %v1560
    %v1569 = vmul.f32 %v1517, %v1561
    %v1570 = vmul.f32 %v1519, %v1560
    %v1571 = vmul.f32 %v1521, %v1561
    %v1572 = vmul.f32 %v1523, %v1560
    %v1573 = vmul.f32 %v1525, %v1561
    %v1574 = vmul.f32 %v1527, %v1560
    %v1575 = vmul.f32 %v1529, %v1561
    %v1576 = vmul.f32 %v1531, %v1560
    %v1577 = vmul.f32 %v1533, %v1561
    %v1579 = vsel %vm736, %v1287, 0
    %v1582 = vsel %vm736, %v1288, 0
    %v1585 = vsel %vm736, %v1289, 0
    %v1588 = vsel %vm736, %v1290, 0
    %1590 = vmatprep.subr.mxu0 0.0
    %1591 = vmatpush1.msra.mxu0 0.0
    %1592 = vmatprep.subr.mxu0 0.0
    %1593 = vmatpush1.msra.mxu0 0.0
    %1594 = vmatprep.subr.mxu0 0.0
    %1595 = vmatpush1.msra.mxu0 0.0
    %1596 = vmatprep.subr.mxu0 0.0
    %1597 = vmatpush1.msra.mxu0 0.0
    %1598 = vmatprep.subr.mxu0 0.0
    %1599 = vmatpush1.msra.mxu0 0.0
    %1600 = vmatprep.subr.mxu0 0.0
    %1601 = vmatpush1.msra.mxu0 0.0
    %1602 = vmatprep.subr.mxu0 0.0
    %1603 = vmatpush1.msra.mxu0 0.0
    %1604 = vmatprep.subr.mxu0 0.0
    %1605 = vmatpush1.msra.mxu0 0.0
    %1606 = vmatprep.subr.mxu0 %v1577
    %1607 = vmatpush1.msra.mxu0 %v1576
    %1608 = vmatprep.subr.mxu0 %v1575
    %1609 = vmatpush1.msra.mxu0 %v1574
    %1610 = vmatprep.subr.mxu0 %v1573
    %1611 = vmatpush1.msra.mxu0 %v1572
    %1612 = vmatprep.subr.mxu0 %v1571
    %1613 = vmatpush1.msra.mxu0 %v1570
    %1614 = vmatprep.subr.mxu0 %v1569
    %1615 = vmatpush1.msra.mxu0 %v1568
    %1616 = vmatprep.subr.mxu0 %v1567
    %1617 = vmatpush1.msra.mxu0 %v1566
    %1618 = vmatprep.subr.mxu0 %v1565
    %1619 = vmatpush1.msra.mxu0 %v1564
    %1620 = vmatprep.subr.mxu0 %v1563
    %1621 = vmatpush1.msra.mxu0 %v1562
    %1622 = vmatprep.subr.mxu0 0.0
    %1623 = vmatpush2.msra.mxu0 0.0
    %1624 = vmatprep.subr.mxu0 0.0
    %1625 = vmatpush2.msra.mxu0 0.0
    %1626 = vmatprep.subr.mxu0 0.0
    %1627 = vmatpush2.msra.mxu0 0.0
    %1628 = vmatprep.subr.mxu0 0.0
    %1629 = vmatpush2.msra.mxu0 0.0
    %1630 = vmatprep.subr.mxu0 0.0
    %1631 = vmatpush2.msra.mxu0 0.0
    %1632 = vmatprep.subr.mxu0 0.0
    %1633 = vmatpush2.msra.mxu0 0.0
    %1634 = vmatprep.subr.mxu0 0.0
    %1635 = vmatpush2.msra.mxu0 0.0
    %1636 = vmatprep.subr.mxu0 0.0
    %1637 = vmatpush2.msra.mxu0 0.0
    %1638 = vmatprep.subr.mxu0 0.0
    %1639 = vmatpush2.msra.mxu0 0.0
    %1640 = vmatprep.subr.mxu0 0.0
    %1641 = vmatpush2.msra.mxu0 0.0
    %1642 = vmatprep.subr.mxu0 0.0
    %1643 = vmatpush2.msra.mxu0 0.0
    %1644 = vmatprep.subr.mxu0 0.0
    %1645 = vmatpush2.msra.mxu0 0.0
    %1646 = vmatprep.subr.mxu0 0.0
    %1647 = vmatpush2.msra.mxu0 0.0
    %1648 = vmatprep.subr.mxu0 0.0
    %1649 = vmatpush2.msra.mxu0 0.0
    %1650 = vmatprep.subr.mxu0 0.0
    %1651 = vmatpush2.msra.mxu0 0.0
    %1652 = vmatprep.subr.mxu0 0.0
    %1653 = vmatpush2.msra.mxu0 0.0
    %1654 = vmatprep.mubr.f32.mxu0 0.0
    %1655 = vmatmul.mubr.f32.gmra.mxu0 %v1579
    %v1656 = vpop.f32.mrf.mxu0
    %v1657 = vadd.f32 0.0, %v1656
    %v1658 = vpop.f32.mrf.mxu0
    %v1659 = vadd.f32 0.0, %v1658
    %1660 = vmatprep.mubr.f32.mxu0 0.0
    %1661 = vmatmul.mubr.f32.gmra.mxu0 %v1582
    %v1662 = vpop.f32.mrf.mxu0
    %v1663 = vadd.f32 0.0, %v1662
    %v1664 = vpop.f32.mrf.mxu0
    %v1665 = vadd.f32 0.0, %v1664
    %1666 = vmatprep.mubr.f32.mxu0 0.0
    %1667 = vmatmul.mubr.f32.gmra.mxu0 %v1585
    %v1668 = vpop.f32.mrf.mxu0
    %v1669 = vadd.f32 0.0, %v1668
    %v1670 = vpop.f32.mrf.mxu0
    %v1671 = vadd.f32 0.0, %v1670
    %1672 = vmatprep.mubr.f32.mxu0 0.0
    %1673 = vmatmul.mubr.f32.gmra.mxu0 %v1588
    %v1674 = vpop.f32.mrf.mxu0
    %v1675 = vadd.f32 0.0, %v1674
    %v1676 = vpop.f32.mrf.mxu0
    %v1677 = vadd.f32 0.0, %v1676
    %1678 = vdwg.mxu0
    %1679 = vmatprep.subr.mxu0 0.0
    %1680 = vmatpush1.msra.mxu0 0.0
    %1681 = vmatprep.subr.mxu0 0.0
    %1682 = vmatpush1.msra.mxu0 0.0
    %1683 = vmatprep.subr.mxu0 0.0
    %1684 = vmatpush1.msra.mxu0 0.0
    %1685 = vmatprep.subr.mxu0 0.0
    %1686 = vmatpush1.msra.mxu0 0.0
    %1687 = vmatprep.subr.mxu0 0.0
    %1688 = vmatpush1.msra.mxu0 0.0
    %1689 = vmatprep.subr.mxu0 0.0
    %1690 = vmatpush1.msra.mxu0 0.0
    %1691 = vmatprep.subr.mxu0 0.0
    %1692 = vmatpush1.msra.mxu0 0.0
    %1693 = vmatprep.subr.mxu0 0.0
    %1694 = vmatpush1.msra.mxu0 0.0
    %1695 = vmatprep.subr.mxu0 %v1286
    %1696 = vmatpush1.msra.mxu0 %v1285
    %1697 = vmatprep.subr.mxu0 %v1284
    %1698 = vmatpush1.msra.mxu0 %v1283
    %1699 = vmatprep.subr.mxu0 %v1282
    %1700 = vmatpush1.msra.mxu0 %v1281
    %1701 = vmatprep.subr.mxu0 %v1280
    %1702 = vmatpush1.msra.mxu0 %v1279
    %1703 = vmatprep.subr.mxu0 %v1677
    %1704 = vmatpush1.msra.mxu0 %v1675
    %1705 = vmatprep.subr.mxu0 %v1671
    %1706 = vmatpush1.msra.mxu0 %v1669
    %1707 = vmatprep.subr.mxu0 %v1665
    %1708 = vmatpush1.msra.mxu0 %v1663
    %1709 = vmatprep.subr.mxu0 %v1659
    %1710 = vmatpush1.msra.mxu0 %v1657
    %1711 = vmatprep.subr.mxu0 0.0
    %1712 = vmatpush2.msra.mxu0 0.0
    %1713 = vmatprep.subr.mxu0 0.0
    %1714 = vmatpush2.msra.mxu0 0.0
    %1715 = vmatprep.subr.mxu0 0.0
    %1716 = vmatpush2.msra.mxu0 0.0
    %1717 = vmatprep.subr.mxu0 0.0
    %1718 = vmatpush2.msra.mxu0 0.0
    %1719 = vmatprep.subr.mxu0 0.0
    %1720 = vmatpush2.msra.mxu0 0.0
    %1721 = vmatprep.subr.mxu0 0.0
    %1722 = vmatpush2.msra.mxu0 0.0
    %1723 = vmatprep.subr.mxu0 0.0
    %1724 = vmatpush2.msra.mxu0 0.0
    %1725 = vmatprep.subr.mxu0 0.0
    %1726 = vmatpush2.msra.mxu0 0.0
    %1727 = vmatprep.subr.mxu0 0.0
    %1728 = vmatpush2.msra.mxu0 0.0
    %1729 = vmatprep.subr.mxu0 0.0
    %1730 = vmatpush2.msra.mxu0 0.0
    %1731 = vmatprep.subr.mxu0 0.0
    %1732 = vmatpush2.msra.mxu0 0.0
    %1733 = vmatprep.subr.mxu0 0.0
    %1734 = vmatpush2.msra.mxu0 0.0
    %1735 = vmatprep.subr.mxu0 0.0
    %1736 = vmatpush2.msra.mxu0 0.0
    %1737 = vmatprep.subr.mxu0 0.0
    %1738 = vmatpush2.msra.mxu0 0.0
    %1739 = vmatprep.subr.mxu0 0.0
    %1740 = vmatpush2.msra.mxu0 0.0
    %1741 = vmatprep.subr.mxu0 0.0
    %1742 = vmatpush2.msra.mxu0 0.0
    %1743 = vmatprep.mubr.f32.mxu0 0.0
    %1744 = vmatmul.mubr.f32.gmra.mxu0 %v879
    %v1745 = vpop.f32.mrf.mxu0
    %v1746 = vadd.f32 %v841, %v1745
    %v1747 = vpop.f32.mrf.mxu0
    %v1748 = vadd.f32 %v841, %v1747
    %1749 = vmatprep.mubr.f32.mxu0 0.0
    %1750 = vmatmul.mubr.f32.gmra.mxu0 %v882
    %v1751 = vpop.f32.mrf.mxu0
    %v1752 = vadd.f32 %v846, %v1751
    %v1753 = vpop.f32.mrf.mxu0
    %v1754 = vadd.f32 %v846, %v1753
    %1755 = vmatprep.mubr.f32.mxu0 0.0
    %1756 = vmatmul.mubr.f32.gmra.mxu0 %v885
    %v1757 = vpop.f32.mrf.mxu0
    %v1758 = vadd.f32 %v851, %v1757
    %v1759 = vpop.f32.mrf.mxu0
    %v1760 = vadd.f32 %v851, %v1759
    %1761 = vmatprep.mubr.f32.mxu0 0.0
    %1762 = vmatmul.mubr.f32.gmra.mxu0 %v888
    %v1763 = vpop.f32.mrf.mxu0
    %v1764 = vadd.f32 %v856, %v1763
    %v1765 = vpop.f32.mrf.mxu0
    %v1766 = vadd.f32 %v856, %v1765
    %1767 = vmatprep.mubr.f32.mxu0 0.0
    %1768 = vmatmul.mubr.f32.gmra.mxu0 %v891
    %v1769 = vpop.f32.mrf.mxu0
    %v1770 = vadd.f32 %v861, %v1769
    %v1771 = vpop.f32.mrf.mxu0
    %v1772 = vadd.f32 %v861, %v1771
    %1773 = vmatprep.mubr.f32.mxu0 0.0
    %1774 = vmatmul.mubr.f32.gmra.mxu0 %v894
    %v1775 = vpop.f32.mrf.mxu0
    %v1776 = vadd.f32 %v866, %v1775
    %v1777 = vpop.f32.mrf.mxu0
    %v1778 = vadd.f32 %v866, %v1777
    %1779 = vmatprep.mubr.f32.mxu0 0.0
    %1780 = vmatmul.mubr.f32.gmra.mxu0 %v897
    %v1781 = vpop.f32.mrf.mxu0
    %v1782 = vadd.f32 %v871, %v1781
    %v1783 = vpop.f32.mrf.mxu0
    %v1784 = vadd.f32 %v871, %v1783
    %1785 = vmatprep.mubr.f32.mxu0 0.0
    %1786 = vmatmul.mubr.f32.gmra.mxu0 %v900
    %v1787 = vpop.f32.mrf.mxu0
    %v1788 = vadd.f32 %v876, %v1787
    %v1789 = vpop.f32.mrf.mxu0
    %v1790 = vadd.f32 %v876, %v1789
    %1791 = vdwg.mxu0
    %v1792 = vmax.f32 %v1746, 0.0
    %v1793 = vmax.f32 %v1748, 0.0
    %v1794 = vmax.f32 %v1752, 0.0
    %v1795 = vmax.f32 %v1754, 0.0
    %v1796 = vmax.f32 %v1758, 0.0
    %v1797 = vmax.f32 %v1760, 0.0
    %v1798 = vmax.f32 %v1764, 0.0
    %v1799 = vmax.f32 %v1766, 0.0
    %v1800 = vmax.f32 %v1770, 0.0
    %v1801 = vmax.f32 %v1772, 0.0
    %v1802 = vmax.f32 %v1776, 0.0
    %v1803 = vmax.f32 %v1778, 0.0
    %v1804 = vmax.f32 %v1782, 0.0
    %v1805 = vmax.f32 %v1784, 0.0
    %v1806 = vmax.f32 %v1788, 0.0
    %v1807 = vmax.f32 %v1790, 0.0
    %s1808 = scalar_lea.vmem [#allocation2], 128
    %1809 = vst [vmem:[%s1808] sm:$0xff] %v1792
    %1810 = vst [vmem:[%s1808 + $0x8] sm:$0xff] %v1793
    %1811 = vst [vmem:[%s1808 + $0x10] sm:$0xff] %v1794
    %1812 = vst [vmem:[%s1808 + $0x18] sm:$0xff] %v1795
    %1813 = vst [vmem:[%s1808 + $0x20] sm:$0xff] %v1796
    %1814 = vst [vmem:[%s1808 + $0x28] sm:$0xff] %v1797
    %1815 = vst [vmem:[%s1808 + $0x30] sm:$0xff] %v1798
    %1816 = vst [vmem:[%s1808 + $0x38] sm:$0xff] %v1799
    %1817 = vst [vmem:[%s1808 + $0x40] sm:$0xff] %v1800
    %1818 = vst [vmem:[%s1808 + $0x48] sm:$0xff] %v1801
    %1819 = vst [vmem:[%s1808 + $0x50] sm:$0xff] %v1802
    %1820 = vst [vmem:[%s1808 + $0x58] sm:$0xff] %v1803
    %1821 = vst [vmem:[%s1808 + $0x60] sm:$0xff] %v1804
    %1822 = vst [vmem:[%s1808 + $0x68] sm:$0xff] %v1805
    %1823 = vst [vmem:[%s1808 + $0x70] sm:$0xff] %v1806
    %1824 = vst [vmem:[%s1808 + $0x78] sm:$0xff] %v1807
    // Predicated region
    $region34: #{tpu_custom_call.1} parent=1 // pred_check
      _
    $region35: #{tpu_custom_call.1} parent=1 // pred_check_branch
      %1826 = sbr.rel (0) target = $region37
    $region36: #{tpu_custom_call.1} parent=1 // pred_region
      %s1828 = ssub.s32 4096, 4096
      %1829 = vsyncadd [#allocation3], %s1828
      %s1830 = sshll.u32 [#allocation2], 4
      %s1831 = int_to_ptr.vmem [resolvable:$true] %s1830
      %1836 = dma.vmem_to_hbm [thread:$0]  %s1831, 4096, %s8, [#allocation3], 256, 256, 16
    $region37: #{tpu_custom_call.1} parent=1 // pred_fallthru
      _
    // Predicated region
    $region38: #{tpu_custom_call.1} parent=1 // pred_check
      _
    $region39: #{tpu_custom_call.1} parent=1 // pred_check_branch
      %1838 = sbr.rel (0) target = $region41
    $region40: #{tpu_custom_call.1} parent=1 // pred_region
      %1839 = dma.done [#allocation3], 4096
    $region41: #{tpu_custom_call.1} parent=1 // pred_fallthru
      _
    %1840 = vsyncpa [#allocation3], 1

</llo_original>
